<compile_context>
chip_gen: v7x
topology: tpu7x:2x2x1
jax: 0.10.0
libtpu: 0.0.40
codegen_flags: <defaults>
</compile_context>

<pallas_src>
import functools

import jax
import jax.numpy as jnp
import numpy as np
from jax.experimental import pallas as pl
from jax.experimental.pallas import tpu as pltpu

HIDDEN = 8
T_STEPS = 100
_TAPS = tuple((dy, dx) for dy in (-1, 0, 1) for dx in (-1, 0, 1))  # (ky-1, kx-1), row-major


# ------------------------------------------------------------------
# Fused kernel: q_sample -> [SR, x_noisy] -> conv1(+emb, swish) -> conv2
#               -> per-block L1(sum) partial.   One grid step == Bt images.
# ------------------------------------------------------------------
def _ddpm_fused_kernel(scal_ref, x3_ref, w1_ref, w2_ref, out_ref, *, W, HW, Bt, hidden):
    N = Bt * HW                            # lane columns handled per grid step
    b0 = pl.program_id(0) * Bt             # first global image of this block

    x3 = x3_ref[...]                       # (3, N): row0=SR, row1=HR, row2=noise
    sr, hr, nz = x3[0:1, :], x3[1:2, :], x3[2:3, :]

    # ---- q_sample: x_noisy = sqrt(a)*HR + sqrt(1-a^2)*noise (per-image SMEM scalars)
    xn_parts = []
    for i in range(Bt):
        a_i = scal_ref[b0 + i, 0]
        s_i = scal_ref[b0 + i, 1]
        sl = slice(i * HW, (i + 1) * HW)   # static, 128-aligned lane slice
        xn_parts.append(a_i * hr[:, sl] + s_i * nz[:, sl])
    x_noisy = xn_parts[0] if Bt == 1 else jnp.concatenate(xn_parts, axis=1)

    inp2 = jnp.concatenate([sr, x_noisy], axis=0)        # (2, N): channels [SR, x_noisy]

    # ---- 3x3 tap validity masks (dx: row wrap, dy: image top/bottom) ----
    col = jax.lax.broadcasted_iota(jnp.int32, (1, N), 1)
    xw = col % W                  # x inside a row
    pin = col % HW                # flat position inside an image
    ok_dx = {-1: xw > 0, 0: None, 1: xw < (W - 1)}
    ok_dy = {-1: pin >= W, 0: None, 1: pin < (HW - W)}

    def tap_shift(arr, dy, dx):
        """arr[:, p + dy*W + dx], zeroed where the source leaves the image.
        Circular lane roll + masks: every wrapped column is also invalid."""
        s = dy * W + dx
        r = pltpu.roll(arr, shift=(-s) % N, axis=1) if s != 0 else arr
        m = ok_dy[dy]
        if ok_dx[dx] is not None:
            m = ok_dx[dx] if m is None else jnp.logical_and(m, ok_dx[dx])
        return r if m is None else jnp.where(m, r, 0.0)

    # ---- conv1 (2 -> hidden): im2col as a VALUE, one MXU matmul (hidden,18)@(18,N)
    im2col = jnp.concatenate([tap_shift(inp2, dy, dx) for dy, dx in _TAPS], axis=0)
    h = jnp.dot(w1_ref[...], im2col, preferred_element_type=jnp.float32)   # (hidden, N)

    # conv1 bias + per-image noise-level embedding (folded into the SMEM table), swish
    subl = jax.lax.broadcasted_iota(jnp.int32, (hidden, 1), 0)
    h_parts = []
    for i in range(Bt):
        bcol = jnp.zeros((hidden, 1), jnp.float32)
        for c in range(hidden):
            bcol = jnp.where(subl == c, scal_ref[b0 + i, 4 + c], bcol)
        sl = slice(i * HW, (i + 1) * HW)
        h_parts.append(h[:, sl] + bcol)
    h = h_parts[0] if Bt == 1 else jnp.concatenate(h_parts, axis=1)
    h = h * jax.nn.sigmoid(h)

    # ---- conv2 (hidden -> 1): tap-by-tap broadcast-FMA, no (9*hidden, N) im2col slab
    acc = jnp.zeros((hidden, N), jnp.float32)
    for t, (dy, dx) in enumerate(_TAPS):
        acc = acc + w2_ref[:, t:t + 1] * tap_shift(h, dy, dx)
    x_recon = jnp.sum(acc, axis=0, keepdims=True) + scal_ref[b0, 2]        # (1, N)

    # ---- L1(reduction='sum') partial for this block of Bt images
    partial = jnp.sum(jnp.abs(nz - x_recon))
    out_ref[...] = jnp.broadcast_to(partial, out_ref.shape)


def _ddpm_fused_call(scal, x3, w1p, w2p, *, W, HW, Bt):
    G = x3.shape[1] // (Bt * HW)
    kernel = functools.partial(_ddpm_fused_kernel, W=W, HW=HW, Bt=Bt, hidden=HIDDEN)
    return pl.pallas_call(
        kernel,
        out_shape=jax.ShapeDtypeStruct((G, 8, 128), jnp.float32),
        grid=(G,),
        in_specs=[
            pl.BlockSpec(memory_space=pltpu.MemorySpace.SMEM),   # (B, 4+hidden) scalar table
            pl.BlockSpec((3, Bt * HW), lambda g: (0, g)),        # stacked SR/HR/noise
            pl.BlockSpec((HIDDEN, 18), lambda g: (0, 0)),        # conv1 weights (Cout, 9*Cin)
            pl.BlockSpec((HIDDEN, 9), lambda g: (0, 0)),         # conv2 weights (Cin, 9)
        ],
        out_specs=pl.BlockSpec((1, 8, 128), lambda g: (g, 0, 0)),
        compiler_params=pltpu.CompilerParams(
            dimension_semantics=("parallel",),                   # megacore on v7x
            vmem_limit_bytes=48 * 1024 * 1024),                  # above v5e/v6e scoped defaults
    )(scal, x3, w1p, w2p)


# ------------------------------------------------------------------
# Params / schedule / noise-level embedding (tiny, stays in XLA)
# ------------------------------------------------------------------
def make_beta_schedule(n_timestep=T_STEPS, linear_start=1e-4, linear_end=2e-2):
    # SR3 'linear' schedule
    betas = np.linspace(linear_start ** 0.5, linear_end ** 0.5, n_timestep,
                        dtype=np.float64) ** 2
    alphas_cumprod = np.cumprod(1.0 - betas)
    return np.sqrt(np.append(1.0, alphas_cumprod)).astype(np.float32)


def init_params(key):
    ks = jax.random.split(key, 8)
    p = {}
    # conv1: 2 -> HIDDEN, conv2: HIDDEN -> 1   (HWIO layout)
    p["w1"] = jax.random.normal(ks[0], (3, 3, 2, HIDDEN), jnp.float32) * 0.1
    p["b1"] = jax.random.normal(ks[1], (HIDDEN,), jnp.float32) * 0.05
    p["w2"] = jax.random.normal(ks[2], (3, 3, HIDDEN, 1), jnp.float32) * 0.1
    p["b2"] = jax.random.normal(ks[3], (1,), jnp.float32) * 0.05
    # noise-level MLP: pos-enc(HIDDEN) -> HIDDEN -> HIDDEN
    p["t_w1"] = jax.random.normal(ks[4], (HIDDEN, HIDDEN), jnp.float32) * 0.1
    p["t_b1"] = jax.random.normal(ks[5], (HIDDEN,), jnp.float32) * 0.05
    p["t_w2"] = jax.random.normal(ks[6], (HIDDEN, HIDDEN), jnp.float32) * 0.1
    p["t_b2"] = jax.random.normal(ks[7], (HIDDEN,), jnp.float32) * 0.05
    return p


def noise_level_embedding(noise_level, params):
    """SR3-style sinusoidal encoding of the continuous sqrt_alpha + small MLP."""
    B = noise_level.shape[0]
    half = HIDDEN // 2
    freqs = jnp.exp(-jnp.log(1e4) * jnp.arange(half, dtype=jnp.float32) / half)
    args = noise_level.reshape(B, 1) * freqs.reshape(1, half) * 1000.0
    pe = jnp.concatenate([jnp.sin(args), jnp.cos(args)], axis=-1)      # (B, HIDDEN)
    h = pe @ params["t_w1"] + params["t_b1"]
    h = h * jax.nn.sigmoid(h)                                          # swish
    return h @ params["t_w2"] + params["t_b2"]                         # (B, HIDDEN)


# ------------------------------------------------------------------
# DDPM forward (p_losses) wrapper — single fused pallas_call
# ------------------------------------------------------------------
def ddpm_forward(params, x_in, noise, sqrt_alpha):
    """p_losses: x_in = {'HR': (B,1,H,W) NCHW, 'SR': (B,1,H,W) NCHW}."""
    x_start = x_in["HR"].astype(jnp.float32)
    cond = x_in["SR"].astype(jnp.float32)
    noise = noise.astype(jnp.float32)
    B, C, H, W = x_start.shape
    HW = H * W
    assert C == 1 and HW % 128 == 0

    # batch tile: as many images per grid step as divide B (<= 8)
    Bt = 8 if B % 8 == 0 else max(d for d in (4, 2, 1) if B % d == 0)

    # ONE stacked channel-major input: (3, B*HW); batch folded into the lane dim.
    x3 = jnp.stack([cond.reshape(B, HW), x_start.reshape(B, HW),
                    noise.reshape(B, HW)], axis=0).reshape(3, B * HW)

    # Per-image SMEM scalar table:
    #   [0] sqrt(a_cumprod)  [1] sqrt(1-a^2)  [2] conv2 bias  [3] pad  [4:] b1 + t_emb
    sa = sqrt_alpha.astype(jnp.float32)
    s1m = jnp.sqrt(jnp.maximum(1.0 - sa * sa, 0.0))
    t_emb = noise_level_embedding(sa, params)                            # (B, HIDDEN)
    b1e = params["b1"][None, :] + t_emb
    scal = jnp.concatenate(
        [sa[:, None], s1m[:, None],
         jnp.broadcast_to(params["b2"], (B,))[:, None],
         jnp.zeros((B, 1), jnp.float32), b1e], axis=1)                   # (B, 4 + HIDDEN)

    # Pack 3x3 weights: conv1 (Cout, 9*Cin) tap-major/ci-minor (no K padding),
    # conv2 (Cin, 9) so each tap is a static (hidden, 1) lane slice.
    w1p = jnp.transpose(params["w1"].reshape(9, 2, HIDDEN), (2, 0, 1)).reshape(HIDDEN, 18)
    w2p = params["w2"].reshape(9, HIDDEN).T                              # (HIDDEN, 9)

    part = _ddpm_fused_call(scal, x3, w1p, w2p, W=W, HW=HW, Bt=Bt)       # (B//Bt, 8, 128)
    return jnp.sum(part[:, 0, 0])


# ------------------------------------------------------------------
# Pure-JAX reference (lax.conv) for numerical sanity check
# ------------------------------------------------------------------
def ddpm_forward_ref(params, x_in, noise, sqrt_alpha):
    x_start = x_in["HR"].astype(jnp.float32)
    cond = x_in["SR"].astype(jnp.float32)
    noise = noise.astype(jnp.float32)
    B = x_start.shape[0]
    sa = sqrt_alpha.reshape(B, 1, 1, 1).astype(jnp.float32)
    x_noisy = sa * x_start + jnp.sqrt(1.0 - sa * sa) * noise
    inp = jnp.transpose(jnp.concatenate([cond, x_noisy], axis=1), (0, 2, 3, 1))  # NHWC
    t_emb = noise_level_embedding(sqrt_alpha.astype(jnp.float32), params)
    h = jax.lax.conv_general_dilated(
        inp, params["w1"], (1, 1), "SAME",
        dimension_numbers=("NHWC", "HWIO", "NHWC"),
        precision=jax.lax.Precision.HIGHEST)
    h = h + params["b1"][None, None, None, :] + t_emb[:, None, None, :]
    h = h * jax.nn.sigmoid(h)
    y = jax.lax.conv_general_dilated(
        h, params["w2"], (1, 1), "SAME",
        dimension_numbers=("NHWC", "HWIO", "NHWC"),
        precision=jax.lax.Precision.HIGHEST)
    y = jnp.transpose(y, (0, 3, 1, 2)) + params["b2"].reshape(1, 1, 1, 1)
    return jnp.sum(jnp.abs(noise - y))


if __name__ == "__main__":
    key = jax.random.PRNGKey(0)
    k_hr, k_sr, k_noise, k_t, k_u, k_p = jax.random.split(key, 6)

    B, C, H, W = 2, 1, 16, 16
    x_in = {
        "HR": jax.random.normal(k_hr, (B, C, H, W), jnp.float32),   # NIR image
        "SR": jax.random.normal(k_sr, (B, C, H, W), jnp.float32),   # depth GT / cond
    }
    noise = jax.random.normal(k_noise, (B, C, H, W), jnp.float32)

    # continuous sqrt(alpha_cumprod) sampled between schedule entries [t-1, t]
    sqrt_acp_prev = jnp.asarray(make_beta_schedule())
    t = jax.random.randint(k_t, (), 1, T_STEPS + 1)
    u = jax.random.uniform(k_u, (B,), jnp.float32)
    lo, hi = sqrt_acp_prev[t - 1], sqrt_acp_prev[t]
    sqrt_alpha = lo + u * (hi - lo)                                  # (B,)

    params = init_params(k_p)

    loss = jax.jit(ddpm_forward)(params, x_in, noise, sqrt_alpha)
    jax.block_until_ready(loss)
    assert jnp.isfinite(loss), "loss is not finite"

    loss_ref = jax.jit(ddpm_forward_ref)(params, x_in, noise, sqrt_alpha)
    jax.block_until_ready(loss_ref)
    rel = abs(float(loss) - float(loss_ref)) / max(abs(float(loss_ref)), 1.0)
    assert rel < 5e-3, f"mismatch: kernel {float(loss)} vs ref {float(loss_ref)} (rel={rel:.2e})"

    print("KERNEL_OK")
</pallas_src>

<mosaic_0001>
module attributes {stable_mosaic.version = 11 : i64} {
  func.func @_ddpm_fused_kernel(%arg0: i32, %arg1: memref<2x12xf32, #tpu.memory_space<smem>>, %arg2: memref<3x512xf32, #tpu.memory_space<vmem>>, %arg3: memref<8x18xf32, #tpu.memory_space<vmem>>, %arg4: memref<8x9xf32, #tpu.memory_space<vmem>>, %arg5: memref<1x8x128xf32, #tpu.memory_space<vmem>>) attributes {dimension_semantics = [#tpu.dimension_semantics<parallel>], iteration_bounds = array<i64: 1>, scalar_prefetch = 0 : i64, scratch_operands = 0 : i64, tpu.core_type = #tpu.core_type<tc>, window_params = [{transform_indices = @transform_0, window_bounds = array<i64: 2, 12>}, {transform_indices = @transform_1, window_bounds = array<i64: 3, 512>}, {pipeline_mode = #tpu.pipeline_mode<synchronous>, transform_indices = @transform_2, window_bounds = array<i64: 8, 18>}, {pipeline_mode = #tpu.pipeline_mode<synchronous>, transform_indices = @transform_3, window_bounds = array<i64: 8, 9>}, {transform_indices = @transform_4, window_bounds = array<i64: 1, 8, 128>}]} {
    %c2_i32 = arith.constant 2 : i32
    %0 = arith.muli %arg0, %c2_i32 : i32
    %c0 = arith.constant 0 : index
    %c0_0 = arith.constant 0 : index
    %1 = vector.load %arg2[%c0, %c0_0] : memref<3x512xf32, #tpu.memory_space<vmem>>, vector<3x512xf32>
    %2 = vector.extract_strided_slice %1 {offsets = [0, 0], sizes = [1, 512], strides = [1, 1]} : vector<3x512xf32> to vector<1x512xf32>
    %3 = vector.extract_strided_slice %1 {offsets = [1, 0], sizes = [1, 512], strides = [1, 1]} : vector<3x512xf32> to vector<1x512xf32>
    %4 = vector.extract_strided_slice %1 {offsets = [2, 0], sizes = [1, 512], strides = [1, 1]} : vector<3x512xf32> to vector<1x512xf32>
    %c0_i32 = arith.constant 0 : i32
    %5 = arith.addi %0, %c0_i32 : i32
    %6 = arith.index_cast %5 : i32 to index
    %c0_1 = arith.constant 0 : index
    %7 = memref.load %arg1[%6, %c0_1] : memref<2x12xf32, #tpu.memory_space<smem>>
    %c0_i32_2 = arith.constant 0 : i32
    %8 = arith.addi %0, %c0_i32_2 : i32
    %9 = arith.index_cast %8 : i32 to index
    %c1 = arith.constant 1 : index
    %10 = memref.load %arg1[%9, %c1] : memref<2x12xf32, #tpu.memory_space<smem>>
    %11 = vector.extract_strided_slice %3 {offsets = [0, 0], sizes = [1, 256], strides = [1, 1]} : vector<1x512xf32> to vector<1x256xf32>
    %12 = vector.broadcast %7 : f32 to vector<1x256xf32>
    %13 = arith.mulf %12, %11 : vector<1x256xf32>
    %14 = vector.extract_strided_slice %4 {offsets = [0, 0], sizes = [1, 256], strides = [1, 1]} : vector<1x512xf32> to vector<1x256xf32>
    %15 = vector.broadcast %10 : f32 to vector<1x256xf32>
    %16 = arith.mulf %15, %14 : vector<1x256xf32>
    %17 = arith.addf %13, %16 : vector<1x256xf32>
    %c1_i32 = arith.constant 1 : i32
    %18 = arith.addi %0, %c1_i32 : i32
    %19 = arith.index_cast %18 : i32 to index
    %c0_3 = arith.constant 0 : index
    %20 = memref.load %arg1[%19, %c0_3] : memref<2x12xf32, #tpu.memory_space<smem>>
    %c1_i32_4 = arith.constant 1 : i32
    %21 = arith.addi %0, %c1_i32_4 : i32
    %22 = arith.index_cast %21 : i32 to index
    %c1_5 = arith.constant 1 : index
    %23 = memref.load %arg1[%22, %c1_5] : memref<2x12xf32, #tpu.memory_space<smem>>
    %24 = vector.extract_strided_slice %3 {offsets = [0, 256], sizes = [1, 256], strides = [1, 1]} : vector<1x512xf32> to vector<1x256xf32>
    %25 = vector.broadcast %20 : f32 to vector<1x256xf32>
    %26 = arith.mulf %25, %24 : vector<1x256xf32>
    %27 = vector.extract_strided_slice %4 {offsets = [0, 256], sizes = [1, 256], strides = [1, 1]} : vector<1x512xf32> to vector<1x256xf32>
    %28 = vector.broadcast %23 : f32 to vector<1x256xf32>
    %29 = arith.mulf %28, %27 : vector<1x256xf32>
    %30 = arith.addf %26, %29 : vector<1x256xf32>
    %31 = tpu.concatenate %17, %30 in 1 : vector<1x256xf32>, vector<1x256xf32> -> vector<1x512xf32>
    %32 = tpu.concatenate %2, %31 in 0 : vector<1x512xf32>, vector<1x512xf32> -> vector<2x512xf32>
    %33 = tpu.iota {dimensions = array<i32: 1>} : vector<1x512xi32>
    %c16_i32 = arith.constant 16 : i32
    %c0_i32_6 = arith.constant 0 : i32
    %34 = arith.cmpi eq, %c16_i32, %c0_i32_6 : i32
    %c1_i32_7 = arith.constant 1 : i32
    %35 = arith.select %34, %c1_i32_7, %c16_i32 : i32
    %36 = vector.broadcast %35 : i32 to vector<1x512xi32>
    %37 = arith.remsi %33, %36 : vector<1x512xi32>
    %c0_i32_8 = arith.constant 0 : i32
    %38 = vector.broadcast %c0_i32_8 : i32 to vector<1x512xi32>
    %39 = arith.cmpi ne, %37, %38 : vector<1x512xi32>
    %c0_i32_9 = arith.constant 0 : i32
    %40 = vector.broadcast %c0_i32_9 : i32 to vector<1x512xi32>
    %41 = arith.cmpi slt, %37, %40 : vector<1x512xi32>
    %c0_i32_10 = arith.constant 0 : i32
    %42 = arith.cmpi slt, %35, %c0_i32_10 : i32
    %43 = vector.broadcast %42 : i1 to vector<1x512xi1>
    %44 = vector.broadcast %43 : vector<1x512xi1> to vector<1x512xi1>
    %45 = arith.xori %41, %44 : vector<1x512xi1>
    %46 = arith.andi %45, %39 : vector<1x512xi1>
    %47 = vector.broadcast %35 : i32 to vector<1x512xi32>
    %48 = arith.addi %37, %47 : vector<1x512xi32>
    %49 = arith.select %46, %48, %37 : vector<1x512xi1>, vector<1x512xi32>
    %c256_i32 = arith.constant 256 : i32
    %c0_i32_11 = arith.constant 0 : i32
    %50 = arith.cmpi eq, %c256_i32, %c0_i32_11 : i32
    %c1_i32_12 = arith.constant 1 : i32
    %51 = arith.select %50, %c1_i32_12, %c256_i32 : i32
    %52 = vector.broadcast %51 : i32 to vector<1x512xi32>
    %53 = arith.remsi %33, %52 : vector<1x512xi32>
    %c0_i32_13 = arith.constant 0 : i32
    %54 = vector.broadcast %c0_i32_13 : i32 to vector<1x512xi32>
    %55 = arith.cmpi ne, %53, %54 : vector<1x512xi32>
    %c0_i32_14 = arith.constant 0 : i32
    %56 = vector.broadcast %c0_i32_14 : i32 to vector<1x512xi32>
    %57 = arith.cmpi slt, %53, %56 : vector<1x512xi32>
    %c0_i32_15 = arith.constant 0 : i32
    %58 = arith.cmpi slt, %51, %c0_i32_15 : i32
    %59 = vector.broadcast %58 : i1 to vector<1x512xi1>
    %60 = vector.broadcast %59 : vector<1x512xi1> to vector<1x512xi1>
    %61 = arith.xori %57, %60 : vector<1x512xi1>
    %62 = arith.andi %61, %55 : vector<1x512xi1>
    %63 = vector.broadcast %51 : i32 to vector<1x512xi32>
    %64 = arith.addi %53, %63 : vector<1x512xi32>
    %65 = arith.select %62, %64, %53 : vector<1x512xi1>, vector<1x512xi32>
    %c0_i32_16 = arith.constant 0 : i32
    %66 = vector.broadcast %c0_i32_16 : i32 to vector<1x512xi32>
    %67 = arith.cmpi sgt, %49, %66 : vector<1x512xi32>
    %c15_i32 = arith.constant 15 : i32
    %68 = vector.broadcast %c15_i32 : i32 to vector<1x512xi32>
    %69 = arith.cmpi slt, %49, %68 : vector<1x512xi32>
    %c16_i32_17 = arith.constant 16 : i32
    %70 = vector.broadcast %c16_i32_17 : i32 to vector<1x512xi32>
    %71 = arith.cmpi sge, %65, %70 : vector<1x512xi32>
    %c240_i32 = arith.constant 240 : i32
    %72 = vector.broadcast %c240_i32 : i32 to vector<1x512xi32>
    %73 = arith.cmpi slt, %65, %72 : vector<1x512xi32>
    %c17_i32 = arith.constant 17 : i32
    %74 = tpu.dynamic_rotate %32 by %c17_i32 dim 1 : vector<2x512xf32>, i32 -> vector<2x512xf32>
    %75 = arith.andi %71, %67 : vector<1x512xi1>
    %cst = arith.constant 0.000000e+00 : f32
    %76 = vector.shape_cast %75 : vector<1x512xi1> to vector<1x512xi1>
    %77 = vector.broadcast %76 : vector<1x512xi1> to vector<2x512xi1>
    %78 = vector.broadcast %cst : f32 to vector<2x512xf32>
    %79 = arith.select %77, %74, %78 : vector<2x512xi1>, vector<2x512xf32>
    %c16_i32_18 = arith.constant 16 : i32
    %80 = tpu.dynamic_rotate %32 by %c16_i32_18 dim 1 : vector<2x512xf32>, i32 -> vector<2x512xf32>
    %cst_19 = arith.constant 0.000000e+00 : f32
    %81 = vector.shape_cast %71 : vector<1x512xi1> to vector<1x512xi1>
    %82 = vector.broadcast %81 : vector<1x512xi1> to vector<2x512xi1>
    %83 = vector.broadcast %cst_19 : f32 to vector<2x512xf32>
    %84 = arith.select %82, %80, %83 : vector<2x512xi1>, vector<2x512xf32>
    %c15_i32_20 = arith.constant 15 : i32
    %85 = tpu.dynamic_rotate %32 by %c15_i32_20 dim 1 : vector<2x512xf32>, i32 -> vector<2x512xf32>
    %86 = arith.andi %71, %69 : vector<1x512xi1>
    %cst_21 = arith.constant 0.000000e+00 : f32
    %87 = vector.shape_cast %86 : vector<1x512xi1> to vector<1x512xi1>
    %88 = vector.broadcast %87 : vector<1x512xi1> to vector<2x512xi1>
    %89 = vector.broadcast %cst_21 : f32 to vector<2x512xf32>
    %90 = arith.select %88, %85, %89 : vector<2x512xi1>, vector<2x512xf32>
    %c1_i32_22 = arith.constant 1 : i32
    %91 = tpu.dynamic_rotate %32 by %c1_i32_22 dim 1 : vector<2x512xf32>, i32 -> vector<2x512xf32>
    %cst_23 = arith.constant 0.000000e+00 : f32
    %92 = vector.shape_cast %67 : vector<1x512xi1> to vector<1x512xi1>
    %93 = vector.broadcast %92 : vector<1x512xi1> to vector<2x512xi1>
    %94 = vector.broadcast %cst_23 : f32 to vector<2x512xf32>
    %95 = arith.select %93, %91, %94 : vector<2x512xi1>, vector<2x512xf32>
    %c511_i32 = arith.constant 511 : i32
    %96 = tpu.dynamic_rotate %32 by %c511_i32 dim 1 : vector<2x512xf32>, i32 -> vector<2x512xf32>
    %cst_24 = arith.constant 0.000000e+00 : f32
    %97 = vector.shape_cast %69 : vector<1x512xi1> to vector<1x512xi1>
    %98 = vector.broadcast %97 : vector<1x512xi1> to vector<2x512xi1>
    %99 = vector.broadcast %cst_24 : f32 to vector<2x512xf32>
    %100 = arith.select %98, %96, %99 : vector<2x512xi1>, vector<2x512xf32>
    %c497_i32 = arith.constant 497 : i32
    %101 = tpu.dynamic_rotate %32 by %c497_i32 dim 1 : vector<2x512xf32>, i32 -> vector<2x512xf32>
    %102 = arith.andi %73, %67 : vector<1x512xi1>
    %cst_25 = arith.constant 0.000000e+00 : f32
    %103 = vector.shape_cast %102 : vector<1x512xi1> to vector<1x512xi1>
    %104 = vector.broadcast %103 : vector<1x512xi1> to vector<2x512xi1>
    %105 = vector.broadcast %cst_25 : f32 to vector<2x512xf32>
    %106 = arith.select %104, %101, %105 : vector<2x512xi1>, vector<2x512xf32>
    %c496_i32 = arith.constant 496 : i32
    %107 = tpu.dynamic_rotate %32 by %c496_i32 dim 1 : vector<2x512xf32>, i32 -> vector<2x512xf32>
    %cst_26 = arith.constant 0.000000e+00 : f32
    %108 = vector.shape_cast %73 : vector<1x512xi1> to vector<1x512xi1>
    %109 = vector.broadcast %108 : vector<1x512xi1> to vector<2x512xi1>
    %110 = vector.broadcast %cst_26 : f32 to vector<2x512xf32>
    %111 = arith.select %109, %107, %110 : vector<2x512xi1>, vector<2x512xf32>
    %c495_i32 = arith.constant 495 : i32
    %112 = tpu.dynamic_rotate %32 by %c495_i32 dim 1 : vector<2x512xf32>, i32 -> vector<2x512xf32>
    %113 = arith.andi %73, %69 : vector<1x512xi1>
    %cst_27 = arith.constant 0.000000e+00 : f32
    %114 = vector.shape_cast %113 : vector<1x512xi1> to vector<1x512xi1>
    %115 = vector.broadcast %114 : vector<1x512xi1> to vector<2x512xi1>
    %116 = vector.broadcast %cst_27 : f32 to vector<2x512xf32>
    %117 = arith.select %115, %112, %116 : vector<2x512xi1>, vector<2x512xf32>
    %118 = tpu.concatenate %79, %84, %90, %95, %32, %100, %106, %111, %117 in 0 : vector<2x512xf32>, vector<2x512xf32>, vector<2x512xf32>, vector<2x512xf32>, vector<2x512xf32>, vector<2x512xf32>, vector<2x512xf32>, vector<2x512xf32>, vector<2x512xf32> -> vector<18x512xf32>
    %c0_28 = arith.constant 0 : index
    %c0_29 = arith.constant 0 : index
    %119 = vector.load %arg3[%c0_28, %c0_29] : memref<8x18xf32, #tpu.memory_space<vmem>>, vector<8x18xf32>
    %cst_30 = arith.constant dense<0.000000e+00> : vector<8x512xf32>
    %120 = tpu.matmul %119, %118, %cst_30 {dimension_numbers = #tpu.dot_dimension_numbers<[1], [0], [0], [1], [0, 0, 1, 1], [], []>} : vector<8x18xf32>, vector<18x512xf32>, vector<8x512xf32> -> vector<8x512xf32>
    %121 = tpu.iota {dimensions = array<i32: 0>} : vector<8x1xi32>
    %cst_31 = arith.constant 0.000000e+00 : f32
    %122 = vector.broadcast %cst_31 : f32 to vector<8x1xf32>
    %c0_i32_32 = arith.constant 0 : i32
    %123 = vector.broadcast %c0_i32_32 : i32 to vector<8x1xi32>
    %124 = arith.cmpi eq, %121, %123 : vector<8x1xi32>
    %c0_i32_33 = arith.constant 0 : i32
    %125 = arith.addi %0, %c0_i32_33 : i32
    %126 = arith.index_cast %125 : i32 to index
    %c4 = arith.constant 4 : index
    %127 = memref.load %arg1[%126, %c4] : memref<2x12xf32, #tpu.memory_space<smem>>
    %128 = vector.broadcast %127 : f32 to vector<8x1xf32>
    %129 = arith.select %124, %128, %122 : vector<8x1xi1>, vector<8x1xf32>
    %c1_i32_34 = arith.constant 1 : i32
    %130 = vector.broadcast %c1_i32_34 : i32 to vector<8x1xi32>
    %131 = arith.cmpi eq, %121, %130 : vector<8x1xi32>
    %c0_i32_35 = arith.constant 0 : i32
    %132 = arith.addi %0, %c0_i32_35 : i32
    %133 = arith.index_cast %132 : i32 to index
    %c5 = arith.constant 5 : index
    %134 = memref.load %arg1[%133, %c5] : memref<2x12xf32, #tpu.memory_space<smem>>
    %135 = vector.broadcast %134 : f32 to vector<8x1xf32>
    %136 = arith.select %131, %135, %129 : vector<8x1xi1>, vector<8x1xf32>
    %c2_i32_36 = arith.constant 2 : i32
    %137 = vector.broadcast %c2_i32_36 : i32 to vector<8x1xi32>
    %138 = arith.cmpi eq, %121, %137 : vector<8x1xi32>
    %c0_i32_37 = arith.constant 0 : i32
    %139 = arith.addi %0, %c0_i32_37 : i32
    %140 = arith.index_cast %139 : i32 to index
    %c6 = arith.constant 6 : index
    %141 = memref.load %arg1[%140, %c6] : memref<2x12xf32, #tpu.memory_space<smem>>
    %142 = vector.broadcast %141 : f32 to vector<8x1xf32>
    %143 = arith.select %138, %142, %136 : vector<8x1xi1>, vector<8x1xf32>
    %c3_i32 = arith.constant 3 : i32
    %144 = vector.broadcast %c3_i32 : i32 to vector<8x1xi32>
    %145 = arith.cmpi eq, %121, %144 : vector<8x1xi32>
    %c0_i32_38 = arith.constant 0 : i32
    %146 = arith.addi %0, %c0_i32_38 : i32
    %147 = arith.index_cast %146 : i32 to index
    %c7 = arith.constant 7 : index
    %148 = memref.load %arg1[%147, %c7] : memref<2x12xf32, #tpu.memory_space<smem>>
    %149 = vector.broadcast %148 : f32 to vector<8x1xf32>
    %150 = arith.select %145, %149, %143 : vector<8x1xi1>, vector<8x1xf32>
    %c4_i32 = arith.constant 4 : i32
    %151 = vector.broadcast %c4_i32 : i32 to vector<8x1xi32>
    %152 = arith.cmpi eq, %121, %151 : vector<8x1xi32>
    %c0_i32_39 = arith.constant 0 : i32
    %153 = arith.addi %0, %c0_i32_39 : i32
    %154 = arith.index_cast %153 : i32 to index
    %c8 = arith.constant 8 : index
    %155 = memref.load %arg1[%154, %c8] : memref<2x12xf32, #tpu.memory_space<smem>>
    %156 = vector.broadcast %155 : f32 to vector<8x1xf32>
    %157 = arith.select %152, %156, %150 : vector<8x1xi1>, vector<8x1xf32>
    %c5_i32 = arith.constant 5 : i32
    %158 = vector.broadcast %c5_i32 : i32 to vector<8x1xi32>
    %159 = arith.cmpi eq, %121, %158 : vector<8x1xi32>
    %c0_i32_40 = arith.constant 0 : i32
    %160 = arith.addi %0, %c0_i32_40 : i32
    %161 = arith.index_cast %160 : i32 to index
    %c9 = arith.constant 9 : index
    %162 = memref.load %arg1[%161, %c9] : memref<2x12xf32, #tpu.memory_space<smem>>
    %163 = vector.broadcast %162 : f32 to vector<8x1xf32>
    %164 = arith.select %159, %163, %157 : vector<8x1xi1>, vector<8x1xf32>
    %c6_i32 = arith.constant 6 : i32
    %165 = vector.broadcast %c6_i32 : i32 to vector<8x1xi32>
    %166 = arith.cmpi eq, %121, %165 : vector<8x1xi32>
    %c0_i32_41 = arith.constant 0 : i32
    %167 = arith.addi %0, %c0_i32_41 : i32
    %168 = arith.index_cast %167 : i32 to index
    %c10 = arith.constant 10 : index
    %169 = memref.load %arg1[%168, %c10] : memref<2x12xf32, #tpu.memory_space<smem>>
    %170 = vector.broadcast %169 : f32 to vector<8x1xf32>
    %171 = arith.select %166, %170, %164 : vector<8x1xi1>, vector<8x1xf32>
    %c7_i32 = arith.constant 7 : i32
    %172 = vector.broadcast %c7_i32 : i32 to vector<8x1xi32>
    %173 = arith.cmpi eq, %121, %172 : vector<8x1xi32>
    %c0_i32_42 = arith.constant 0 : i32
    %174 = arith.addi %0, %c0_i32_42 : i32
    %175 = arith.index_cast %174 : i32 to index
    %c11 = arith.constant 11 : index
    %176 = memref.load %arg1[%175, %c11] : memref<2x12xf32, #tpu.memory_space<smem>>
    %177 = vector.broadcast %176 : f32 to vector<8x1xf32>
    %178 = arith.select %173, %177, %171 : vector<8x1xi1>, vector<8x1xf32>
    %179 = vector.extract_strided_slice %120 {offsets = [0, 0], sizes = [8, 256], strides = [1, 1]} : vector<8x512xf32> to vector<8x256xf32>
    %180 = vector.broadcast %178 : vector<8x1xf32> to vector<8x256xf32>
    %181 = arith.addf %179, %180 : vector<8x256xf32>
    %cst_43 = arith.constant 0.000000e+00 : f32
    %182 = vector.broadcast %cst_43 : f32 to vector<8x1xf32>
    %c0_i32_44 = arith.constant 0 : i32
    %183 = vector.broadcast %c0_i32_44 : i32 to vector<8x1xi32>
    %184 = arith.cmpi eq, %121, %183 : vector<8x1xi32>
    %c1_i32_45 = arith.constant 1 : i32
    %185 = arith.addi %0, %c1_i32_45 : i32
    %186 = arith.index_cast %185 : i32 to index
    %c4_46 = arith.constant 4 : index
    %187 = memref.load %arg1[%186, %c4_46] : memref<2x12xf32, #tpu.memory_space<smem>>
    %188 = vector.broadcast %187 : f32 to vector<8x1xf32>
    %189 = arith.select %184, %188, %182 : vector<8x1xi1>, vector<8x1xf32>
    %c1_i32_47 = arith.constant 1 : i32
    %190 = vector.broadcast %c1_i32_47 : i32 to vector<8x1xi32>
    %191 = arith.cmpi eq, %121, %190 : vector<8x1xi32>
    %c1_i32_48 = arith.constant 1 : i32
    %192 = arith.addi %0, %c1_i32_48 : i32
    %193 = arith.index_cast %192 : i32 to index
    %c5_49 = arith.constant 5 : index
    %194 = memref.load %arg1[%193, %c5_49] : memref<2x12xf32, #tpu.memory_space<smem>>
    %195 = vector.broadcast %194 : f32 to vector<8x1xf32>
    %196 = arith.select %191, %195, %189 : vector<8x1xi1>, vector<8x1xf32>
    %c2_i32_50 = arith.constant 2 : i32
    %197 = vector.broadcast %c2_i32_50 : i32 to vector<8x1xi32>
    %198 = arith.cmpi eq, %121, %197 : vector<8x1xi32>
    %c1_i32_51 = arith.constant 1 : i32
    %199 = arith.addi %0, %c1_i32_51 : i32
    %200 = arith.index_cast %199 : i32 to index
    %c6_52 = arith.constant 6 : index
    %201 = memref.load %arg1[%200, %c6_52] : memref<2x12xf32, #tpu.memory_space<smem>>
    %202 = vector.broadcast %201 : f32 to vector<8x1xf32>
    %203 = arith.select %198, %202, %196 : vector<8x1xi1>, vector<8x1xf32>
    %c3_i32_53 = arith.constant 3 : i32
    %204 = vector.broadcast %c3_i32_53 : i32 to vector<8x1xi32>
    %205 = arith.cmpi eq, %121, %204 : vector<8x1xi32>
    %c1_i32_54 = arith.constant 1 : i32
    %206 = arith.addi %0, %c1_i32_54 : i32
    %207 = arith.index_cast %206 : i32 to index
    %c7_55 = arith.constant 7 : index
    %208 = memref.load %arg1[%207, %c7_55] : memref<2x12xf32, #tpu.memory_space<smem>>
    %209 = vector.broadcast %208 : f32 to vector<8x1xf32>
    %210 = arith.select %205, %209, %203 : vector<8x1xi1>, vector<8x1xf32>
    %c4_i32_56 = arith.constant 4 : i32
    %211 = vector.broadcast %c4_i32_56 : i32 to vector<8x1xi32>
    %212 = arith.cmpi eq, %121, %211 : vector<8x1xi32>
    %c1_i32_57 = arith.constant 1 : i32
    %213 = arith.addi %0, %c1_i32_57 : i32
    %214 = arith.index_cast %213 : i32 to index
    %c8_58 = arith.constant 8 : index
    %215 = memref.load %arg1[%214, %c8_58] : memref<2x12xf32, #tpu.memory_space<smem>>
    %216 = vector.broadcast %215 : f32 to vector<8x1xf32>
    %217 = arith.select %212, %216, %210 : vector<8x1xi1>, vector<8x1xf32>
    %c5_i32_59 = arith.constant 5 : i32
    %218 = vector.broadcast %c5_i32_59 : i32 to vector<8x1xi32>
    %219 = arith.cmpi eq, %121, %218 : vector<8x1xi32>
    %c1_i32_60 = arith.constant 1 : i32
    %220 = arith.addi %0, %c1_i32_60 : i32
    %221 = arith.index_cast %220 : i32 to index
    %c9_61 = arith.constant 9 : index
    %222 = memref.load %arg1[%221, %c9_61] : memref<2x12xf32, #tpu.memory_space<smem>>
    %223 = vector.broadcast %222 : f32 to vector<8x1xf32>
    %224 = arith.select %219, %223, %217 : vector<8x1xi1>, vector<8x1xf32>
    %c6_i32_62 = arith.constant 6 : i32
    %225 = vector.broadcast %c6_i32_62 : i32 to vector<8x1xi32>
    %226 = arith.cmpi eq, %121, %225 : vector<8x1xi32>
    %c1_i32_63 = arith.constant 1 : i32
    %227 = arith.addi %0, %c1_i32_63 : i32
    %228 = arith.index_cast %227 : i32 to index
    %c10_64 = arith.constant 10 : index
    %229 = memref.load %arg1[%228, %c10_64] : memref<2x12xf32, #tpu.memory_space<smem>>
    %230 = vector.broadcast %229 : f32 to vector<8x1xf32>
    %231 = arith.select %226, %230, %224 : vector<8x1xi1>, vector<8x1xf32>
    %c7_i32_65 = arith.constant 7 : i32
    %232 = vector.broadcast %c7_i32_65 : i32 to vector<8x1xi32>
    %233 = arith.cmpi eq, %121, %232 : vector<8x1xi32>
    %c1_i32_66 = arith.constant 1 : i32
    %234 = arith.addi %0, %c1_i32_66 : i32
    %235 = arith.index_cast %234 : i32 to index
    %c11_67 = arith.constant 11 : index
    %236 = memref.load %arg1[%235, %c11_67] : memref<2x12xf32, #tpu.memory_space<smem>>
    %237 = vector.broadcast %236 : f32 to vector<8x1xf32>
    %238 = arith.select %233, %237, %231 : vector<8x1xi1>, vector<8x1xf32>
    %239 = vector.extract_strided_slice %120 {offsets = [0, 256], sizes = [8, 256], strides = [1, 1]} : vector<8x512xf32> to vector<8x256xf32>
    %240 = vector.broadcast %238 : vector<8x1xf32> to vector<8x256xf32>
    %241 = arith.addf %239, %240 : vector<8x256xf32>
    %242 = tpu.concatenate %181, %241 in 1 : vector<8x256xf32>, vector<8x256xf32> -> vector<8x512xf32>
    %243 = arith.negf %242 : vector<8x512xf32>
    %244 = math.exp %243 : vector<8x512xf32>
    %cst_68 = arith.constant 1.000000e+00 : f32
    %245 = vector.broadcast %cst_68 : f32 to vector<8x512xf32>
    %246 = arith.addf %245, %244 : vector<8x512xf32>
    %247 = arith.divf %245, %246 : vector<8x512xf32>
    %248 = arith.mulf %242, %247 : vector<8x512xf32>
    %cst_69 = arith.constant 0.000000e+00 : f32
    %249 = vector.broadcast %cst_69 : f32 to vector<8x512xf32>
    %c0_70 = arith.constant 0 : index
    %c0_71 = arith.constant 0 : index
    %250 = vector.load %arg4[%c0_70, %c0_71] : memref<8x9xf32, #tpu.memory_space<vmem>>, vector<8x1xf32>
    %c17_i32_72 = arith.constant 17 : i32
    %251 = tpu.dynamic_rotate %248 by %c17_i32_72 dim 1 : vector<8x512xf32>, i32 -> vector<8x512xf32>
    %252 = arith.andi %71, %67 : vector<1x512xi1>
    %cst_73 = arith.constant 0.000000e+00 : f32
    %253 = vector.shape_cast %252 : vector<1x512xi1> to vector<1x512xi1>
    %254 = vector.broadcast %253 : vector<1x512xi1> to vector<8x512xi1>
    %255 = vector.broadcast %cst_73 : f32 to vector<8x512xf32>
    %256 = arith.select %254, %251, %255 : vector<8x512xi1>, vector<8x512xf32>
    %257 = vector.broadcast %250 : vector<8x1xf32> to vector<8x512xf32>
    %258 = arith.mulf %257, %256 : vector<8x512xf32>
    %259 = arith.addf %249, %258 : vector<8x512xf32>
    %c0_74 = arith.constant 0 : index
    %c1_75 = arith.constant 1 : index
    %260 = vector.load %arg4[%c0_74, %c1_75] : memref<8x9xf32, #tpu.memory_space<vmem>>, vector<8x1xf32>
    %c16_i32_76 = arith.constant 16 : i32
    %261 = tpu.dynamic_rotate %248 by %c16_i32_76 dim 1 : vector<8x512xf32>, i32 -> vector<8x512xf32>
    %cst_77 = arith.constant 0.000000e+00 : f32
    %262 = vector.shape_cast %71 : vector<1x512xi1> to vector<1x512xi1>
    %263 = vector.broadcast %262 : vector<1x512xi1> to vector<8x512xi1>
    %264 = vector.broadcast %cst_77 : f32 to vector<8x512xf32>
    %265 = arith.select %263, %261, %264 : vector<8x512xi1>, vector<8x512xf32>
    %266 = vector.broadcast %260 : vector<8x1xf32> to vector<8x512xf32>
    %267 = arith.mulf %266, %265 : vector<8x512xf32>
    %268 = arith.addf %259, %267 : vector<8x512xf32>
    %c0_78 = arith.constant 0 : index
    %c2 = arith.constant 2 : index
    %269 = vector.load %arg4[%c0_78, %c2] : memref<8x9xf32, #tpu.memory_space<vmem>>, vector<8x1xf32>
    %c15_i32_79 = arith.constant 15 : i32
    %270 = tpu.dynamic_rotate %248 by %c15_i32_79 dim 1 : vector<8x512xf32>, i32 -> vector<8x512xf32>
    %271 = arith.andi %71, %69 : vector<1x512xi1>
    %cst_80 = arith.constant 0.000000e+00 : f32
    %272 = vector.shape_cast %271 : vector<1x512xi1> to vector<1x512xi1>
    %273 = vector.broadcast %272 : vector<1x512xi1> to vector<8x512xi1>
    %274 = vector.broadcast %cst_80 : f32 to vector<8x512xf32>
    %275 = arith.select %273, %270, %274 : vector<8x512xi1>, vector<8x512xf32>
    %276 = vector.broadcast %269 : vector<8x1xf32> to vector<8x512xf32>
    %277 = arith.mulf %276, %275 : vector<8x512xf32>
    %278 = arith.addf %268, %277 : vector<8x512xf32>
    %c0_81 = arith.constant 0 : index
    %c3 = arith.constant 3 : index
    %279 = vector.load %arg4[%c0_81, %c3] : memref<8x9xf32, #tpu.memory_space<vmem>>, vector<8x1xf32>
    %c1_i32_82 = arith.constant 1 : i32
    %280 = tpu.dynamic_rotate %248 by %c1_i32_82 dim 1 : vector<8x512xf32>, i32 -> vector<8x512xf32>
    %cst_83 = arith.constant 0.000000e+00 : f32
    %281 = vector.shape_cast %67 : vector<1x512xi1> to vector<1x512xi1>
    %282 = vector.broadcast %281 : vector<1x512xi1> to vector<8x512xi1>
    %283 = vector.broadcast %cst_83 : f32 to vector<8x512xf32>
    %284 = arith.select %282, %280, %283 : vector<8x512xi1>, vector<8x512xf32>
    %285 = vector.broadcast %279 : vector<8x1xf32> to vector<8x512xf32>
    %286 = arith.mulf %285, %284 : vector<8x512xf32>
    %287 = arith.addf %278, %286 : vector<8x512xf32>
    %c0_84 = arith.constant 0 : index
    %c4_85 = arith.constant 4 : index
    %288 = vector.load %arg4[%c0_84, %c4_85] : memref<8x9xf32, #tpu.memory_space<vmem>>, vector<8x1xf32>
    %289 = vector.broadcast %288 : vector<8x1xf32> to vector<8x512xf32>
    %290 = arith.mulf %289, %248 : vector<8x512xf32>
    %291 = arith.addf %287, %290 : vector<8x512xf32>
    %c0_86 = arith.constant 0 : index
    %c5_87 = arith.constant 5 : index
    %292 = vector.load %arg4[%c0_86, %c5_87] : memref<8x9xf32, #tpu.memory_space<vmem>>, vector<8x1xf32>
    %c511_i32_88 = arith.constant 511 : i32
    %293 = tpu.dynamic_rotate %248 by %c511_i32_88 dim 1 : vector<8x512xf32>, i32 -> vector<8x512xf32>
    %cst_89 = arith.constant 0.000000e+00 : f32
    %294 = vector.shape_cast %69 : vector<1x512xi1> to vector<1x512xi1>
    %295 = vector.broadcast %294 : vector<1x512xi1> to vector<8x512xi1>
    %296 = vector.broadcast %cst_89 : f32 to vector<8x512xf32>
    %297 = arith.select %295, %293, %296 : vector<8x512xi1>, vector<8x512xf32>
    %298 = vector.broadcast %292 : vector<8x1xf32> to vector<8x512xf32>
    %299 = arith.mulf %298, %297 : vector<8x512xf32>
    %300 = arith.addf %291, %299 : vector<8x512xf32>
    %c0_90 = arith.constant 0 : index
    %c6_91 = arith.constant 6 : index
    %301 = vector.load %arg4[%c0_90, %c6_91] : memref<8x9xf32, #tpu.memory_space<vmem>>, vector<8x1xf32>
    %c497_i32_92 = arith.constant 497 : i32
    %302 = tpu.dynamic_rotate %248 by %c497_i32_92 dim 1 : vector<8x512xf32>, i32 -> vector<8x512xf32>
    %303 = arith.andi %73, %67 : vector<1x512xi1>
    %cst_93 = arith.constant 0.000000e+00 : f32
    %304 = vector.shape_cast %303 : vector<1x512xi1> to vector<1x512xi1>
    %305 = vector.broadcast %304 : vector<1x512xi1> to vector<8x512xi1>
    %306 = vector.broadcast %cst_93 : f32 to vector<8x512xf32>
    %307 = arith.select %305, %302, %306 : vector<8x512xi1>, vector<8x512xf32>
    %308 = vector.broadcast %301 : vector<8x1xf32> to vector<8x512xf32>
    %309 = arith.mulf %308, %307 : vector<8x512xf32>
    %310 = arith.addf %300, %309 : vector<8x512xf32>
    %c0_94 = arith.constant 0 : index
    %c7_95 = arith.constant 7 : index
    %311 = vector.load %arg4[%c0_94, %c7_95] : memref<8x9xf32, #tpu.memory_space<vmem>>, vector<8x1xf32>
    %c496_i32_96 = arith.constant 496 : i32
    %312 = tpu.dynamic_rotate %248 by %c496_i32_96 dim 1 : vector<8x512xf32>, i32 -> vector<8x512xf32>
    %cst_97 = arith.constant 0.000000e+00 : f32
    %313 = vector.shape_cast %73 : vector<1x512xi1> to vector<1x512xi1>
    %314 = vector.broadcast %313 : vector<1x512xi1> to vector<8x512xi1>
    %315 = vector.broadcast %cst_97 : f32 to vector<8x512xf32>
    %316 = arith.select %314, %312, %315 : vector<8x512xi1>, vector<8x512xf32>
    %317 = vector.broadcast %311 : vector<8x1xf32> to vector<8x512xf32>
    %318 = arith.mulf %317, %316 : vector<8x512xf32>
    %319 = arith.addf %310, %318 : vector<8x512xf32>
    %c0_98 = arith.constant 0 : index
    %c8_99 = arith.constant 8 : index
    %320 = vector.load %arg4[%c0_98, %c8_99] : memref<8x9xf32, #tpu.memory_space<vmem>>, vector<8x1xf32>
    %c495_i32_100 = arith.constant 495 : i32
    %321 = tpu.dynamic_rotate %248 by %c495_i32_100 dim 1 : vector<8x512xf32>, i32 -> vector<8x512xf32>
    %322 = arith.andi %73, %69 : vector<1x512xi1>
    %cst_101 = arith.constant 0.000000e+00 : f32
    %323 = vector.shape_cast %322 : vector<1x512xi1> to vector<1x512xi1>
    %324 = vector.broadcast %323 : vector<1x512xi1> to vector<8x512xi1>
    %325 = vector.broadcast %cst_101 : f32 to vector<8x512xf32>
    %326 = arith.select %324, %321, %325 : vector<8x512xi1>, vector<8x512xf32>
    %327 = vector.broadcast %320 : vector<8x1xf32> to vector<8x512xf32>
    %328 = arith.mulf %327, %326 : vector<8x512xf32>
    %329 = arith.addf %319, %328 : vector<8x512xf32>
    %cst_102 = arith.constant dense<0.000000e+00> : vector<512xf32>
    %330 = vector.multi_reduction <add>, %329, %cst_102 [0] : vector<8x512xf32> to vector<512xf32>
    %331 = vector.shape_cast %330 : vector<512xf32> to vector<1x512xf32>
    %332 = arith.index_cast %0 : i32 to index
    %c2_103 = arith.constant 2 : index
    %333 = memref.load %arg1[%332, %c2_103] : memref<2x12xf32, #tpu.memory_space<smem>>
    %334 = vector.broadcast %333 : f32 to vector<1x512xf32>
    %335 = arith.addf %331, %334 : vector<1x512xf32>
    %336 = arith.subf %4, %335 : vector<1x512xf32>
    %337 = math.absf %336 : vector<1x512xf32>
    %338 = vector.shape_cast %337 : vector<1x512xf32> to vector<1x1x512xf32>
    %cst_104 = arith.constant dense<0.000000e+00> : vector<1xf32>
    %339 = vector.multi_reduction <add>, %338, %cst_104 [1, 2] : vector<1x1x512xf32> to vector<1xf32>
    %340 = vector.shape_cast %339 : vector<1xf32> to vector<1x1x1xf32>
    %341 = vector.extract %340[0, 0, 0] : f32 from vector<1x1x1xf32>
    %342 = vector.broadcast %341 : f32 to vector<1x8x128xf32>
    %c0_105 = arith.constant 0 : index
    %c0_106 = arith.constant 0 : index
    %c0_107 = arith.constant 0 : index
    %343 = vector.load %arg5[%c0_105, %c0_106, %c0_107] : memref<1x8x128xf32, #tpu.memory_space<vmem>>, vector<1x8x128xf32>
    tpu.vector_store %arg5[%c0_105, %c0_106, %c0_107], %342 {strides = array<i32>} : memref<1x8x128xf32, #tpu.memory_space<vmem>>, vector<1x8x128xf32>,
    return
  }
  func.func @transform_0(%arg0: i32) -> (i32, i32) {
    %c0_i32 = arith.constant 0 : i32
    %c0_i32_0 = arith.constant 0 : i32
    %c0_i32_1 = arith.constant 0 : i32
    return %c0_i32, %c0_i32_0 : i32, i32
  }
  func.func @transform_1(%arg0: i32) -> (i32, i32) {
    %c0_i32 = arith.constant 0 : i32
    %c0_i32_0 = arith.constant 0 : i32
    return %c0_i32, %arg0 : i32, i32
  }
  func.func @transform_2(%arg0: i32) -> (i32, i32) {
    %c0_i32 = arith.constant 0 : i32
    %c0_i32_0 = arith.constant 0 : i32
    %c0_i32_1 = arith.constant 0 : i32
    return %c0_i32, %c0_i32_0 : i32, i32
  }
  func.func @transform_3(%arg0: i32) -> (i32, i32) {
    %c0_i32 = arith.constant 0 : i32
    %c0_i32_0 = arith.constant 0 : i32
    %c0_i32_1 = arith.constant 0 : i32
    return %c0_i32, %c0_i32_0 : i32, i32
  }
  func.func @transform_4(%arg0: i32) -> (i32, i32, i32) {
    %c0_i32 = arith.constant 0 : i32
    %c0_i32_0 = arith.constant 0 : i32
    %c0_i32_1 = arith.constant 0 : i32
    return %arg0, %c0_i32, %c0_i32_0 : i32, i32, i32
  }
}

</mosaic_0001>

<llo_original>
// kernel: ddpm_forward.1
$region0: #{ddpm_forward.1}
  #allocation0 [shape = 'u32[]', space=smem, size = 0x4, offset = 0x4, fixed_abs, tag = 'smem constant byte address 0x4 - core index']
  #allocation1 [shape = 'u32[144,128]{1,0:T(1,128)}', space=vmem, size = 0x12000, scoped, tag = 'internal scratch']
  %s0 = inlined_call_operand.vmem [shape: f32[2,12], index: 0, kind: input, shape index: {}]
  %s1 = inlined_call_operand.vmem [shape: f32[3,512], index: 1, kind: input, shape index: {}]
  %s2 = inlined_call_operand.vmem [shape: f32[8,18], index: 2, kind: input, shape index: {}]
  %s3 = inlined_call_operand.vmem [shape: f32[8,9], index: 3, kind: input, shape index: {}]
  %s4 = inlined_call_operand.vmem [shape: f32[1,8,128], index: 4, kind: output, shape index: {}]
  %s5 = sld [smem:[#allocation0]]
  $region30: #{ddpm_forward.1} parent=0
    _
  %s7 = ssub.s32 1, %s5
  %s8 = scalar_select 0, %s7, %s5
  $region1: #{ddpm_forward.1} parent=0
    #allocation2 [shape = 'u8[1024]{0}', space=smem, size = 0x400, scoped, tag = 'input window, operand 0, single buffered']
    #allocation3 [shape = 's32[1]{0}', space=sflag, size = 0x4, scoped, tag = 'scoped memory for ddpm_forward.1']
    %9 = vsyncpa [#allocation3], 0
    // Predicated region
    $region2: #{ddpm_forward.1} parent=1 // pred_check
      _
    $region3: #{ddpm_forward.1} parent=1 // pred_check_branch
      %11 = sbr.rel (0) target = $region5
    $region4: #{ddpm_forward.1} parent=1 // pred_region
      %s13 = ssub.s32 32, 32
      %14 = vsyncadd [#allocation3], %s13
      %s16 = sshll.u32 %s0, 4
      %s17 = int_to_ptr.vmem [resolvable:$true] %s16
      %19 = dma.vmem_to_smem %s17, 32, [#allocation2], [#allocation3]
    $region5: #{ddpm_forward.1} parent=1 // pred_fallthru
      _
    // Predicated region
    $region6: #{ddpm_forward.1} parent=1 // pred_check
      _
    $region7: #{ddpm_forward.1} parent=1 // pred_check_branch
      %21 = sbr.rel (0) target = $region9
    $region8: #{ddpm_forward.1} parent=1 // pred_region
      _
    $region9: #{ddpm_forward.1} parent=1 // pred_fallthru
      _
    // Predicated region
    $region10: #{ddpm_forward.1} parent=1 // pred_check
      _
    $region11: #{ddpm_forward.1} parent=1 // pred_check_branch
      %23 = sbr.rel (0) target = $region13
    $region12: #{ddpm_forward.1} parent=1 // pred_region
      _
    $region13: #{ddpm_forward.1} parent=1 // pred_fallthru
      _
    // Predicated region
    $region14: #{ddpm_forward.1} parent=1 // pred_check
      _
    $region15: #{ddpm_forward.1} parent=1 // pred_check_branch
      %25 = sbr.rel (0) target = $region17
    $region16: #{ddpm_forward.1} parent=1 // pred_region
      _
    $region17: #{ddpm_forward.1} parent=1 // pred_fallthru
      _
    // Predicated region
    $region18: #{ddpm_forward.1} parent=1 // pred_check
      _
    $region19: #{ddpm_forward.1} parent=1 // pred_check_branch
      %27 = sbr.rel (0) target = $region21
    $region20: #{ddpm_forward.1} parent=1 // pred_region
      %28 = dma.done [#allocation3], 32
    $region21: #{ddpm_forward.1} parent=1 // pred_fallthru
      _
    %29 = sfence
    %s30 = smul.u32 0, 2
    %v31 = vld [vmem:[%s1] sm:$0x77]
    %v32 = vld [vmem:[%s1 + $0x8] sm:$0x77]
    %s33 = smul.u32 %s30, 128
    %s34 = sld [smem:[#allocation2 + %s33]]
    %s35 = sadd.s32 %s33, 1
    %s36 = sld [smem:[#allocation2 + %s35]]
    %v37 = vstv %s34
    %v38 = vmul.f32 %v37, %v31
    %v39 = vstv %s36
    %v40 = vmul.f32 %v39, %v31
    %v42 = vrot.slane %v40, 5
    %v43 = vrot.slane %v42, 4
    %v45 = vadd.f32 %v38, %v43
    %s46 = sadd.s32 %s30, 1
    %s47 = smul.u32 %s46, 128
    %s48 = sld [smem:[#allocation2 + %s47]]
    %s49 = sadd.s32 %s47, 1
    %s50 = sld [smem:[#allocation2 + %s49]]
    %v51 = vstv %s48
    %v52 = vmul.f32 %v51, %v32
    %v53 = vstv %s50
    %v54 = vmul.f32 %v53, %v32
    %v56 = vrot.slane %v54, 5
    %v57 = vrot.slane %v56, 4
    %v59 = vadd.f32 %v52, %v57
    %v61 = vlaneseq
    %v62 = vshrl.u32 %v61, 7
    %v63 = vsub.s32 1, %v62
    %v64 = vrot.slane %v45, %v63
    %v65 = vlaneseq
    %v66 = vshrl.u32 %v65, 7
    %v67 = vsub.s32 5, %v66
    %v68 = vrot.slane %v45, %v67
    %v72 = vlaneseq
    %v73 = vshrl.u32 %v72, 7
    %v74 = vsub.s32 1, %v73
    %v75 = vrot.slane %v59, %v74
    %v76 = vlaneseq
    %v77 = vshrl.u32 %v76, 7
    %v78 = vsub.s32 5, %v77
    %v79 = vrot.slane %v59, %v78
    %v84 = vlaneseq
    %v85 = vshrl.u32 %v84, 7
    %v86 = vsub.s32 0, %v85
    %v87 = vrot.slane %v31, %v86
    %v88 = vlaneseq
    %v89 = vshrl.u32 %v88, 7
    %v90 = vsub.s32 4, %v89
    %v91 = vrot.slane %v31, %v90
    %v92 = vlaneseq
    %v93 = vshrl.u32 %v92, 7
    %v94 = vsub.s32 0, %v93
    %v95 = vrot.slane %v32, %v94
    %v96 = vlaneseq
    %v97 = vshrl.u32 %v96, 7
    %v98 = vsub.s32 4, %v97
    %v99 = vrot.slane %v32, %v98
    %vm104 = vcmask 1040384
    %v105 = vsel %vm104, %v87, %v64
    %v106 = vsel %vm104, %v91, %v68
    %v107 = vsel %vm104, %v95, %v75
    %v108 = vsel %vm104, %v99, %v79
    %v109 = vlaneseq
    %v110 = vand.u32 %v109, 127
    %v111 = vadd.s32 %v110, 128
    %v112 = vadd.s32 %v110, 256
    %v113 = vadd.s32 %v110, 384
    %vm114 = vcmp.lt.s32.totalorder %v110, 0
    %v115 = vsub.s32 0, %v110
    %v116 = vsel %vm114, %v115, %v110
    %v117 = vshrl.u32 %v116, 4
    %v118 = vand.u32 %v116, 15
    %v119 = vsub.s32 0, %v118
    %v120 = vsel %vm114, %v119, %v118
    %vm121 = vcmp.lt.s32.totalorder %v111, 0
    %v122 = vsub.s32 0, %v111
    %v123 = vsel %vm121, %v122, %v111
    %v124 = vshrl.u32 %v123, 4
    %v125 = vand.u32 %v123, 15
    %v126 = vsub.s32 0, %v125
    %v127 = vsel %vm121, %v126, %v125
    %vm128 = vcmp.lt.s32.totalorder %v112, 0
    %v129 = vsub.s32 0, %v112
    %v130 = vsel %vm128, %v129, %v112
    %v131 = vshrl.u32 %v130, 4
    %v132 = vand.u32 %v130, 15
    %v133 = vsub.s32 0, %v132
    %v134 = vsel %vm128, %v133, %v132
    %vm135 = vcmp.lt.s32.totalorder %v113, 0
    %v136 = vsub.s32 0, %v113
    %v137 = vsel %vm135, %v136, %v113
    %v138 = vshrl.u32 %v137, 4
    %v139 = vand.u32 %v137, 15
    %v140 = vsub.s32 0, %v139
    %v141 = vsel %vm135, %v140, %v139
    %vm142 = vcmp.ne.s32.totalorder %v120, 0
    %vm143 = vcmp.ne.s32.totalorder %v127, 0
    %vm144 = vcmp.ne.s32.totalorder %v134, 0
    %vm145 = vcmp.ne.s32.totalorder %v141, 0
    %vm146 = vcmp.lt.s32.totalorder %v120, 0
    %vm147 = vcmp.lt.s32.totalorder %v127, 0
    %vm148 = vcmp.lt.s32.totalorder %v134, 0
    %vm149 = vcmp.lt.s32.totalorder %v141, 0
    %vm150 = vmand %vm146, %vm142
    %vm151 = vmand %vm147, %vm143
    %vm152 = vmand %vm148, %vm144
    %vm153 = vmand %vm149, %vm145
    %v154 = vadd.s32 %v120, 16
    %v155 = vadd.s32 %v127, 16
    %v156 = vadd.s32 %v134, 16
    %v157 = vadd.s32 %v141, 16
    %v158 = vsel %vm150, %v154, %v120
    %v159 = vsel %vm151, %v155, %v127
    %v160 = vsel %vm152, %v156, %v134
    %v161 = vsel %vm153, %v157, %v141
    %vm162 = vcmp.lt.s32.totalorder %v110, 0
    %v163 = vsub.s32 0, %v110
    %v164 = vsel %vm162, %v163, %v110
    %v165 = vshrl.u32 %v164, 8
    %v166 = vand.u32 %v164, 255
    %v167 = vsub.s32 0, %v166
    %v168 = vsel %vm162, %v167, %v166
    %vm169 = vcmp.lt.s32.totalorder %v111, 0
    %v170 = vsub.s32 0, %v111
    %v171 = vsel %vm169, %v170, %v111
    %v172 = vshrl.u32 %v171, 8
    %v173 = vand.u32 %v171, 255
    %v174 = vsub.s32 0, %v173
    %v175 = vsel %vm169, %v174, %v173
    %vm176 = vcmp.lt.s32.totalorder %v112, 0
    %v177 = vsub.s32 0, %v112
    %v178 = vsel %vm176, %v177, %v112
    %v179 = vshrl.u32 %v178, 8
    %v180 = vand.u32 %v178, 255
    %v181 = vsub.s32 0, %v180
    %v182 = vsel %vm176, %v181, %v180
    %vm183 = vcmp.lt.s32.totalorder %v113, 0
    %v184 = vsub.s32 0, %v113
    %v185 = vsel %vm183, %v184, %v113
    %v186 = vshrl.u32 %v185, 8
    %v187 = vand.u32 %v185, 255
    %v188 = vsub.s32 0, %v187
    %v189 = vsel %vm183, %v188, %v187
    %vm190 = vcmp.ne.s32.totalorder %v168, 0
    %vm191 = vcmp.ne.s32.totalorder %v175, 0
    %vm192 = vcmp.ne.s32.totalorder %v182, 0
    %vm193 = vcmp.ne.s32.totalorder %v189, 0
    %vm194 = vcmp.lt.s32.totalorder %v168, 0
    %vm195 = vcmp.lt.s32.totalorder %v175, 0
    %vm196 = vcmp.lt.s32.totalorder %v182, 0
    %vm197 = vcmp.lt.s32.totalorder %v189, 0
    %vm198 = vmand %vm194, %vm190
    %vm199 = vmand %vm195, %vm191
    %vm200 = vmand %vm196, %vm192
    %vm201 = vmand %vm197, %vm193
    %v202 = vadd.s32 %v168, 256
    %v203 = vadd.s32 %v175, 256
    %v204 = vadd.s32 %v182, 256
    %v205 = vadd.s32 %v189, 256
    %v206 = vsel %vm198, %v202, %v168
    %v207 = vsel %vm199, %v203, %v175
    %v208 = vsel %vm200, %v204, %v182
    %v209 = vsel %vm201, %v205, %v189
    %vm210 = vcmp.gt.s32.totalorder %v158, 0
    %vm211 = vcmp.gt.s32.totalorder %v159, 0
    %vm212 = vcmp.gt.s32.totalorder %v160, 0
    %vm213 = vcmp.gt.s32.totalorder %v161, 0
    %vm214 = vcmp.lt.s32.totalorder %v158, 15
    %vm215 = vcmp.lt.s32.totalorder %v159, 15
    %vm216 = vcmp.lt.s32.totalorder %v160, 15
    %vm217 = vcmp.lt.s32.totalorder %v161, 15
    %vm218 = vcmp.ge.s32.totalorder %v206, 16
    %vm219 = vcmp.ge.s32.totalorder %v207, 16
    %vm220 = vcmp.ge.s32.totalorder %v208, 16
    %vm221 = vcmp.ge.s32.totalorder %v209, 16
    %vm222 = vcmp.lt.s32.totalorder %v206, 240
    %vm223 = vcmp.lt.s32.totalorder %v207, 240
    %vm224 = vcmp.lt.s32.totalorder %v208, 240
    %vm225 = vcmp.lt.s32.totalorder %v209, 240
    %226 = vrot.lane.b32.xlu0 %v105, 17
    %v227 = vpop.permute.xlu0 %226
    %228 = vrot.lane.b32.xlu0 %v106, 17
    %v229 = vpop.permute.xlu0 %228
    %230 = vrot.lane.b32.xlu0 %v107, 17
    %v231 = vpop.permute.xlu0 %230
    %232 = vrot.lane.b32.xlu0 %v108, 17
    %v233 = vpop.permute.xlu0 %232
    %vm234 = vcmp.lt.s32.totalorder %v110, 17
    %v235 = vsel %vm234, %v231, %v233
    %v236 = vsel %vm234, %v229, %v231
    %v237 = vsel %vm234, %v227, %v229
    %v238 = vsel %vm234, %v233, %v227
    %vm239 = vmand %vm218, %vm210
    %vm240 = vmand %vm219, %vm211
    %vm241 = vmand %vm220, %vm212
    %vm242 = vmand %vm221, %vm213
    %v243 = vsel %vm239, 1, 0
    %v244 = vsel %vm240, 1, 0
    %v245 = vsel %vm241, 1, 0
    %v246 = vsel %vm242, 1, 0
    %vm247 = vcmp.eq.s32.totalorder %v243, 1
    %vm248 = vcmp.eq.s32.totalorder %v244, 1
    %vm249 = vcmp.eq.s32.totalorder %v245, 1
    %vm250 = vcmp.eq.s32.totalorder %v246, 1
    %v251 = vsel %vm247, %v238, 0.0
    %v252 = vsel %vm248, %v237, 0.0
    %v253 = vsel %vm249, %v236, 0.0
    %v254 = vsel %vm250, %v235, 0.0
    %255 = vrot.lane.b32.xlu0 %v105, 16
    %v256 = vpop.permute.xlu0 %255
    %257 = vrot.lane.b32.xlu0 %v106, 16
    %v258 = vpop.permute.xlu0 %257
    %259 = vrot.lane.b32.xlu0 %v107, 16
    %v260 = vpop.permute.xlu0 %259
    %261 = vrot.lane.b32.xlu0 %v108, 16
    %v262 = vpop.permute.xlu0 %261
    %vm263 = vcmp.lt.s32.totalorder %v110, 16
    %v264 = vsel %vm263, %v260, %v262
    %v265 = vsel %vm263, %v258, %v260
    %v266 = vsel %vm263, %v256, %v258
    %v267 = vsel %vm263, %v262, %v256
    %v268 = vsel %vm218, 1, 0
    %v269 = vsel %vm219, 1, 0
    %v270 = vsel %vm220, 1, 0
    %v271 = vsel %vm221, 1, 0
    %vm272 = vcmp.eq.s32.totalorder %v268, 1
    %vm273 = vcmp.eq.s32.totalorder %v269, 1
    %vm274 = vcmp.eq.s32.totalorder %v270, 1
    %vm275 = vcmp.eq.s32.totalorder %v271, 1
    %v276 = vsel %vm272, %v267, 0.0
    %v277 = vsel %vm273, %v266, 0.0
    %v278 = vsel %vm274, %v265, 0.0
    %v279 = vsel %vm275, %v264, 0.0
    %280 = vrot.lane.b32.xlu0 %v105, 15
    %v281 = vpop.permute.xlu0 %280
    %282 = vrot.lane.b32.xlu0 %v106, 15
    %v283 = vpop.permute.xlu0 %282
    %284 = vrot.lane.b32.xlu0 %v107, 15
    %v285 = vpop.permute.xlu0 %284
    %286 = vrot.lane.b32.xlu0 %v108, 15
    %v287 = vpop.permute.xlu0 %286
    %vm288 = vcmp.lt.s32.totalorder %v110, 15
    %v289 = vsel %vm288, %v285, %v287
    %v290 = vsel %vm288, %v283, %v285
    %v291 = vsel %vm288, %v281, %v283
    %v292 = vsel %vm288, %v287, %v281
    %vm293 = vmand %vm218, %vm214
    %vm294 = vmand %vm219, %vm215
    %vm295 = vmand %vm220, %vm216
    %vm296 = vmand %vm221, %vm217
    %v297 = vsel %vm293, 1, 0
    %v298 = vsel %vm294, 1, 0
    %v299 = vsel %vm295, 1, 0
    %v300 = vsel %vm296, 1, 0
    %vm301 = vcmp.eq.s32.totalorder %v297, 1
    %vm302 = vcmp.eq.s32.totalorder %v298, 1
    %vm303 = vcmp.eq.s32.totalorder %v299, 1
    %vm304 = vcmp.eq.s32.totalorder %v300, 1
    %v305 = vsel %vm301, %v292, 0.0
    %v306 = vsel %vm302, %v291, 0.0
    %v307 = vsel %vm303, %v290, 0.0
    %v308 = vsel %vm304, %v289, 0.0
    %309 = vrot.lane.b32.xlu0 %v105, 1
    %v310 = vpop.permute.xlu0 %309
    %311 = vrot.lane.b32.xlu0 %v106, 1
    %v312 = vpop.permute.xlu0 %311
    %313 = vrot.lane.b32.xlu0 %v107, 1
    %v314 = vpop.permute.xlu0 %313
    %315 = vrot.lane.b32.xlu0 %v108, 1
    %v316 = vpop.permute.xlu0 %315
    %vm317 = vcmp.lt.s32.totalorder %v110, 1
    %v318 = vsel %vm317, %v314, %v316
    %v319 = vsel %vm317, %v312, %v314
    %v320 = vsel %vm317, %v310, %v312
    %v321 = vsel %vm317, %v316, %v310
    %v322 = vsel %vm210, 1, 0
    %v323 = vsel %vm211, 1, 0
    %v324 = vsel %vm212, 1, 0
    %v325 = vsel %vm213, 1, 0
    %vm326 = vcmp.eq.s32.totalorder %v322, 1
    %vm327 = vcmp.eq.s32.totalorder %v323, 1
    %vm328 = vcmp.eq.s32.totalorder %v324, 1
    %vm329 = vcmp.eq.s32.totalorder %v325, 1
    %v330 = vsel %vm326, %v321, 0.0
    %v331 = vsel %vm327, %v320, 0.0
    %v332 = vsel %vm328, %v319, 0.0
    %v333 = vsel %vm329, %v318, 0.0
    %334 = vrot.lane.b32.xlu0 %v105, 127
    %v335 = vpop.permute.xlu0 %334
    %336 = vrot.lane.b32.xlu0 %v106, 127
    %v337 = vpop.permute.xlu0 %336
    %338 = vrot.lane.b32.xlu0 %v107, 127
    %v339 = vpop.permute.xlu0 %338
    %340 = vrot.lane.b32.xlu0 %v108, 127
    %v341 = vpop.permute.xlu0 %340
    %vm342 = vcmp.lt.s32.totalorder %v110, 127
    %v343 = vsel %vm342, %v339, %v341
    %v344 = vsel %vm342, %v337, %v339
    %v345 = vsel %vm342, %v335, %v337
    %v346 = vsel %vm342, %v341, %v335
    %v347 = vsel %vm214, 1, 0
    %v348 = vsel %vm215, 1, 0
    %v349 = vsel %vm216, 1, 0
    %v350 = vsel %vm217, 1, 0
    %vm351 = vcmp.eq.s32.totalorder %v347, 1
    %vm352 = vcmp.eq.s32.totalorder %v348, 1
    %vm353 = vcmp.eq.s32.totalorder %v349, 1
    %vm354 = vcmp.eq.s32.totalorder %v350, 1
    %v355 = vsel %vm351, %v345, 0.0
    %v356 = vsel %vm352, %v344, 0.0
    %v357 = vsel %vm353, %v343, 0.0
    %v358 = vsel %vm354, %v346, 0.0
    %359 = vrot.lane.b32.xlu0 %v105, 113
    %v360 = vpop.permute.xlu0 %359
    %361 = vrot.lane.b32.xlu0 %v106, 113
    %v362 = vpop.permute.xlu0 %361
    %363 = vrot.lane.b32.xlu0 %v107, 113
    %v364 = vpop.permute.xlu0 %363
    %365 = vrot.lane.b32.xlu0 %v108, 113
    %v366 = vpop.permute.xlu0 %365
    %vm367 = vcmp.lt.s32.totalorder %v110, 113
    %v368 = vsel %vm367, %v364, %v366
    %v369 = vsel %vm367, %v362, %v364
    %v370 = vsel %vm367, %v360, %v362
    %v371 = vsel %vm367, %v366, %v360
    %vm372 = vmand %vm222, %vm210
    %vm373 = vmand %vm223, %vm211
    %vm374 = vmand %vm224, %vm212
    %vm375 = vmand %vm225, %vm213
    %v376 = vsel %vm372, 1, 0
    %v377 = vsel %vm373, 1, 0
    %v378 = vsel %vm374, 1, 0
    %v379 = vsel %vm375, 1, 0
    %vm380 = vcmp.eq.s32.totalorder %v376, 1
    %vm381 = vcmp.eq.s32.totalorder %v377, 1
    %vm382 = vcmp.eq.s32.totalorder %v378, 1
    %vm383 = vcmp.eq.s32.totalorder %v379, 1
    %v384 = vsel %vm380, %v370, 0.0
    %v385 = vsel %vm381, %v369, 0.0
    %v386 = vsel %vm382, %v368, 0.0
    %v387 = vsel %vm383, %v371, 0.0
    %388 = vrot.lane.b32.xlu0 %v105, 112
    %v389 = vpop.permute.xlu0 %388
    %390 = vrot.lane.b32.xlu0 %v106, 112
    %v391 = vpop.permute.xlu0 %390
    %392 = vrot.lane.b32.xlu0 %v107, 112
    %v393 = vpop.permute.xlu0 %392
    %394 = vrot.lane.b32.xlu0 %v108, 112
    %v395 = vpop.permute.xlu0 %394
    %vm396 = vcmp.lt.s32.totalorder %v110, 112
    %v397 = vsel %vm396, %v393, %v395
    %v398 = vsel %vm396, %v391, %v393
    %v399 = vsel %vm396, %v389, %v391
    %v400 = vsel %vm396, %v395, %v389
    %v401 = vsel %vm222, 1, 0
    %v402 = vsel %vm223, 1, 0
    %v403 = vsel %vm224, 1, 0
    %v404 = vsel %vm225, 1, 0
    %vm405 = vcmp.eq.s32.totalorder %v401, 1
    %vm406 = vcmp.eq.s32.totalorder %v402, 1
    %vm407 = vcmp.eq.s32.totalorder %v403, 1
    %vm408 = vcmp.eq.s32.totalorder %v404, 1
    %v409 = vsel %vm405, %v399, 0.0
    %v410 = vsel %vm406, %v398, 0.0
    %v411 = vsel %vm407, %v397, 0.0
    %v412 = vsel %vm408, %v400, 0.0
    %413 = vrot.lane.b32.xlu0 %v105, 111
    %v414 = vpop.permute.xlu0 %413
    %415 = vrot.lane.b32.xlu0 %v106, 111
    %v416 = vpop.permute.xlu0 %415
    %417 = vrot.lane.b32.xlu0 %v107, 111
    %v418 = vpop.permute.xlu0 %417
    %419 = vrot.lane.b32.xlu0 %v108, 111
    %v420 = vpop.permute.xlu0 %419
    %vm421 = vcmp.lt.s32.totalorder %v110, 111
    %v422 = vsel %vm421, %v418, %v420
    %v423 = vsel %vm421, %v416, %v418
    %v424 = vsel %vm421, %v414, %v416
    %v425 = vsel %vm421, %v420, %v414
    %vm426 = vmand %vm222, %vm214
    %vm427 = vmand %vm223, %vm215
    %vm428 = vmand %vm224, %vm216
    %vm429 = vmand %vm225, %vm217
    %v430 = vsel %vm426, 1, 0
    %v431 = vsel %vm427, 1, 0
    %v432 = vsel %vm428, 1, 0
    %v433 = vsel %vm429, 1, 0
    %vm434 = vcmp.eq.s32.totalorder %v430, 1
    %vm435 = vcmp.eq.s32.totalorder %v431, 1
    %vm436 = vcmp.eq.s32.totalorder %v432, 1
    %vm437 = vcmp.eq.s32.totalorder %v433, 1
    %v438 = vsel %vm434, %v424, 0.0
    %v439 = vsel %vm435, %v423, 0.0
    %v440 = vsel %vm436, %v422, 0.0
    %v441 = vsel %vm437, %v425, 0.0
    %v446 = vrot.slane %v276, 6
    %v447 = vrot.slane %v277, 6
    %v448 = vrot.slane %v278, 6
    %v449 = vrot.slane %v279, 6
    %v458 = vrot.slane %v305, 4
    %v459 = vrot.slane %v306, 4
    %v460 = vrot.slane %v307, 4
    %v461 = vrot.slane %v308, 4
    %v470 = vrot.slane %v330, 2
    %v471 = vrot.slane %v331, 2
    %v472 = vrot.slane %v332, 2
    %v473 = vrot.slane %v333, 2
    %v482 = vrot.slane %v355, 6
    %v483 = vrot.slane %v356, 6
    %v484 = vrot.slane %v357, 6
    %v485 = vrot.slane %v358, 6
    %v494 = vrot.slane %v384, 4
    %v495 = vrot.slane %v385, 4
    %v496 = vrot.slane %v386, 4
    %v497 = vrot.slane %v387, 4
    %v506 = vrot.slane %v409, 2
    %v507 = vrot.slane %v410, 2
    %v508 = vrot.slane %v411, 2
    %v509 = vrot.slane %v412, 2
    %vm514 = vcmask 1041408
    %v515 = vsel %vm514, %v251, %v446
    %v516 = vsel %vm514, %v252, %v447
    %v517 = vsel %vm514, %v253, %v448
    %v518 = vsel %vm514, %v254, %v449
    %vm519 = vcmask 1043456
    %v520 = vsel %vm519, %v515, %v458
    %v521 = vsel %vm519, %v516, %v459
    %v522 = vsel %vm519, %v517, %v460
    %v523 = vsel %vm519, %v518, %v461
    %vm524 = vcmask 1045504
    %v525 = vsel %vm524, %v520, %v470
    %v526 = vsel %vm524, %v521, %v471
    %v527 = vsel %vm524, %v522, %v472
    %v528 = vsel %vm524, %v523, %v473
    %v529 = vsel %vm514, %v105, %v482
    %v530 = vsel %vm514, %v106, %v483
    %v531 = vsel %vm514, %v107, %v484
    %v532 = vsel %vm514, %v108, %v485
    %v533 = vsel %vm519, %v529, %v494
    %v534 = vsel %vm519, %v530, %v495
    %v535 = vsel %vm519, %v531, %v496
    %v536 = vsel %vm519, %v532, %v497
    %v537 = vsel %vm524, %v533, %v506
    %v538 = vsel %vm524, %v534, %v507
    %v539 = vsel %vm524, %v535, %v508
    %v540 = vsel %vm524, %v536, %v509
    %v541 = vld [vmem:[%s2] sm:$0xff]
    %vm542 = vcmask 146432
    %v544 = vsel %vm542, %v541, 0
    %v547 = vsel %vm514, %v438, 0
    %v550 = vsel %vm514, %v439, 0
    %v553 = vsel %vm514, %v440, 0
    %v556 = vsel %vm514, %v441, 0
    %558 = vmatprep.subr.mxu0 %v526
    %559 = vmatpush1.msra.mxu0 %v525
    %560 = vmatprep.subr.mxu0 %v538
    %561 = vmatpush1.msra.mxu0 %v537
    %562 = vmatprep.subr.mxu0 %v550
    %563 = vmatpush1.msra.mxu0 %v547
    %564 = vmatprep.subr.mxu0 0.0
    %565 = vmatpush1.msra.mxu0 0.0
    %566 = vmatprep.subr.mxu0 0.0
    %567 = vmatpush1.msra.mxu0 0.0
    %568 = vmatprep.subr.mxu0 0.0
    %569 = vmatpush1.msra.mxu0 0.0
    %570 = vmatprep.subr.mxu0 0.0
    %571 = vmatpush1.msra.mxu0 0.0
    %572 = vmatprep.subr.mxu0 0.0
    %573 = vmatpush1.msra.mxu0 0.0
    %574 = vmatprep.subr.mxu0 0.0
    %575 = vmatpush1.msra.mxu0 0.0
    %576 = vmatprep.subr.mxu0 0.0
    %577 = vmatpush1.msra.mxu0 0.0
    %578 = vmatprep.subr.mxu0 0.0
    %579 = vmatpush1.msra.mxu0 0.0
    %580 = vmatprep.subr.mxu0 0.0
    %581 = vmatpush1.msra.mxu0 0.0
    %582 = vmatprep.subr.mxu0 0.0
    %583 = vmatpush1.msra.mxu0 0.0
    %584 = vmatprep.subr.mxu0 0.0
    %585 = vmatpush1.msra.mxu0 0.0
    %586 = vmatprep.subr.mxu0 0.0
    %587 = vmatpush1.msra.mxu0 0.0
    %588 = vmatprep.subr.mxu0 0.0
    %589 = vmatpush1.msra.mxu0 0.0
    %590 = vmatprep.subr.mxu0 0.0
    %591 = vmatpush1.msra.mxu0 0.0
    %592 = vmatprep.subr.mxu0 0.0
    %593 = vmatpush1.msra.mxu0 0.0
    %594 = vmatprep.subr.mxu0 0.0
    %595 = vmatpush1.msra.mxu0 0.0
    %596 = vmatprep.subr.mxu0 0.0
    %597 = vmatpush1.msra.mxu0 0.0
    %598 = vmatprep.subr.mxu0 0.0
    %599 = vmatpush1.msra.mxu0 0.0
    %600 = vmatprep.subr.mxu0 0.0
    %601 = vmatpush1.msra.mxu0 0.0
    %602 = vmatprep.subr.mxu0 0.0
    %603 = vmatpush1.msra.mxu0 0.0
    %604 = vmatprep.subr.mxu0 0.0
    %605 = vmatpush1.msra.mxu0 0.0
    %606 = vmatprep.subr.mxu0 0.0
    %607 = vmatpush1.msra.mxu0 0.0
    %608 = vmatprep.subr.mxu0 0.0
    %609 = vmatpush1.msra.mxu0 0.0
    %610 = vmatprep.subr.mxu0 0.0
    %611 = vmatpush1.msra.mxu0 0.0
    %612 = vmatprep.subr.mxu0 0.0
    %613 = vmatpush1.msra.mxu0 0.0
    %614 = vmatprep.subr.mxu0 0.0
    %615 = vmatpush1.msra.mxu0 0.0
    %616 = vmatprep.subr.mxu0 0.0
    %617 = vmatpush1.msra.mxu0 0.0
    %618 = vmatprep.subr.mxu0 0.0
    %619 = vmatpush1.msra.mxu0 0.0
    %620 = vmatprep.subr.mxu0 0.0
    %621 = vmatpush1.msra.mxu0 0.0
    %622 = vmatprep.mubr.f32.mxu0 0.0
    %623 = vmatmul.mubr.f32.gmra.mrb[0].mxu0 %v544
    %v624 = vpop.f32.mrb[0].mxu0
    %v625 = vadd.f32 0.0, %v624
    %v626 = vpop.f32.mrb[0].mxu0
    %v627 = vadd.f32 0.0, %v626
    %628 = vdwg.mxu0
    %629 = vmatprep.subr.mxu0 %v528
    %630 = vmatpush1.msra.mxu0 %v527
    %631 = vmatprep.subr.mxu0 %v540
    %632 = vmatpush1.msra.mxu0 %v539
    %633 = vmatprep.subr.mxu0 %v556
    %634 = vmatpush1.msra.mxu0 %v553
    %635 = vmatprep.subr.mxu0 0.0
    %636 = vmatpush1.msra.mxu0 0.0
    %637 = vmatprep.subr.mxu0 0.0
    %638 = vmatpush1.msra.mxu0 0.0
    %639 = vmatprep.subr.mxu0 0.0
    %640 = vmatpush1.msra.mxu0 0.0
    %641 = vmatprep.subr.mxu0 0.0
    %642 = vmatpush1.msra.mxu0 0.0
    %643 = vmatprep.subr.mxu0 0.0
    %644 = vmatpush1.msra.mxu0 0.0
    %645 = vmatprep.subr.mxu0 0.0
    %646 = vmatpush1.msra.mxu0 0.0
    %647 = vmatprep.subr.mxu0 0.0
    %648 = vmatpush1.msra.mxu0 0.0
    %649 = vmatprep.subr.mxu0 0.0
    %650 = vmatpush1.msra.mxu0 0.0
    %651 = vmatprep.subr.mxu0 0.0
    %652 = vmatpush1.msra.mxu0 0.0
    %653 = vmatprep.subr.mxu0 0.0
    %654 = vmatpush1.msra.mxu0 0.0
    %655 = vmatprep.subr.mxu0 0.0
    %656 = vmatpush1.msra.mxu0 0.0
    %657 = vmatprep.subr.mxu0 0.0
    %658 = vmatpush1.msra.mxu0 0.0
    %659 = vmatprep.subr.mxu0 0.0
    %660 = vmatpush1.msra.mxu0 0.0
    %661 = vmatprep.subr.mxu0 0.0
    %662 = vmatpush1.msra.mxu0 0.0
    %663 = vmatprep.subr.mxu0 0.0
    %664 = vmatpush1.msra.mxu0 0.0
    %665 = vmatprep.subr.mxu0 0.0
    %666 = vmatpush1.msra.mxu0 0.0
    %667 = vmatprep.subr.mxu0 0.0
    %668 = vmatpush1.msra.mxu0 0.0
    %669 = vmatprep.subr.mxu0 0.0
    %670 = vmatpush1.msra.mxu0 0.0
    %671 = vmatprep.subr.mxu0 0.0
    %672 = vmatpush1.msra.mxu0 0.0
    %673 = vmatprep.subr.mxu0 0.0
    %674 = vmatpush1.msra.mxu0 0.0
    %675 = vmatprep.subr.mxu0 0.0
    %676 = vmatpush1.msra.mxu0 0.0
    %677 = vmatprep.subr.mxu0 0.0
    %678 = vmatpush1.msra.mxu0 0.0
    %679 = vmatprep.subr.mxu0 0.0
    %680 = vmatpush1.msra.mxu0 0.0
    %681 = vmatprep.subr.mxu0 0.0
    %682 = vmatpush1.msra.mxu0 0.0
    %683 = vmatprep.subr.mxu0 0.0
    %684 = vmatpush1.msra.mxu0 0.0
    %685 = vmatprep.subr.mxu0 0.0
    %686 = vmatpush1.msra.mxu0 0.0
    %687 = vmatprep.subr.mxu0 0.0
    %688 = vmatpush1.msra.mxu0 0.0
    %689 = vmatprep.subr.mxu0 0.0
    %690 = vmatpush1.msra.mxu0 0.0
    %691 = vmatprep.subr.mxu0 0.0
    %692 = vmatpush1.msra.mxu0 0.0
    %693 = vmatprep.mubr.f32.mxu0 0.0
    %694 = vmatmul.mubr.f32.gmra.mrb[0].mxu0 %v544
    %v695 = vpop.f32.mrb[0].mxu0
    %v696 = vadd.f32 0.0, %v695
    %v697 = vpop.f32.mrb[0].mxu0
    %v698 = vadd.f32 0.0, %v697
    %699 = vdwg.mxu0
    %v700 = vlaneseq
    %v701 = vshrl.u32 %v700, 7
    %vm702 = vcmp.eq.s32.totalorder %v701, 0
    %s703 = sadd.s32 %s33, 4
    %s704 = sld [smem:[#allocation2 + %s703]]
    %v705 = vstv %s704
    %v706 = vsel %vm702, %v705, 0.0
    %vm707 = vcmp.eq.s32.totalorder %v701, 1
    %s708 = sadd.s32 %s33, 5
    %s709 = sld [smem:[#allocation2 + %s708]]
    %v710 = vstv %s709
    %v711 = vsel %vm707, %v710, %v706
    %vm712 = vcmp.eq.s32.totalorder %v701, 2
    %s713 = sadd.s32 %s33, 6
    %s714 = sld [smem:[#allocation2 + %s713]]
    %v715 = vstv %s714
    %v716 = vsel %vm712, %v715, %v711
    %vm717 = vcmp.eq.s32.totalorder %v701, 3
    %s718 = sadd.s32 %s33, 7
    %s719 = sld [smem:[#allocation2 + %s718]]
    %v720 = vstv %s719
    %v721 = vsel %vm717, %v720, %v716
    %vm722 = vcmp.eq.s32.totalorder %v701, 4
    %s723 = sadd.s32 %s33, 8
    %s724 = sld [smem:[#allocation2 + %s723]]
    %v725 = vstv %s724
    %v726 = vsel %vm722, %v725, %v721
    %vm727 = vcmp.eq.s32.totalorder %v701, 5
    %s728 = sadd.s32 %s33, 9
    %s729 = sld [smem:[#allocation2 + %s728]]
    %v730 = vstv %s729
    %v731 = vsel %vm727, %v730, %v726
    %vm732 = vcmp.eq.s32.totalorder %v701, 6
    %s733 = sadd.s32 %s33, 10
    %s734 = sld [smem:[#allocation2 + %s733]]
    %v735 = vstv %s734
    %v736 = vsel %vm732, %v735, %v731
    %vm737 = vcmp.eq.s32.totalorder %v701, 7
    %s738 = sadd.s32 %s33, 11
    %s739 = sld [smem:[#allocation2 + %s738]]
    %v740 = vstv %s739
    %v741 = vsel %vm737, %v740, %v736
    %v742 = vadd.f32 %v625, %v741
    %v743 = vadd.f32 %v627, %v741
    %s744 = sadd.s32 %s47, 4
    %s745 = sld [smem:[#allocation2 + %s744]]
    %v746 = vstv %s745
    %v747 = vsel %vm702, %v746, 0.0
    %s748 = sadd.s32 %s47, 5
    %s749 = sld [smem:[#allocation2 + %s748]]
    %v750 = vstv %s749
    %v751 = vsel %vm707, %v750, %v747
    %s752 = sadd.s32 %s47, 6
    %s753 = sld [smem:[#allocation2 + %s752]]
    %v754 = vstv %s753
    %v755 = vsel %vm712, %v754, %v751
    %s756 = sadd.s32 %s47, 7
    %s757 = sld [smem:[#allocation2 + %s756]]
    %v758 = vstv %s757
    %v759 = vsel %vm717, %v758, %v755
    %s760 = sadd.s32 %s47, 8
    %s761 = sld [smem:[#allocation2 + %s760]]
    %v762 = vstv %s761
    %v763 = vsel %vm722, %v762, %v759
    %s764 = sadd.s32 %s47, 9
    %s765 = sld [smem:[#allocation2 + %s764]]
    %v766 = vstv %s765
    %v767 = vsel %vm727, %v766, %v763
    %s768 = sadd.s32 %s47, 10
    %s769 = sld [smem:[#allocation2 + %s768]]
    %v770 = vstv %s769
    %v771 = vsel %vm732, %v770, %v767
    %s772 = sadd.s32 %s47, 11
    %s773 = sld [smem:[#allocation2 + %s772]]
    %v774 = vstv %s773
    %v775 = vsel %vm737, %v774, %v771
    %v776 = vadd.f32 %v696, %v775
    %v777 = vadd.f32 %v698, %v775
    %v778 = vxor.u32 %v742, 2147483648
    %v779 = vxor.u32 %v743, 2147483648
    %v780 = vxor.u32 %v776, 2147483648
    %v781 = vxor.u32 %v777, 2147483648
    %v782 = vmul.f32 %v778, 1.442695
    %v783 = vpow.pop %v782
    %v784 = vmul.f32 %v779, 1.442695
    %v785 = vpow.pop %v784
    %v786 = vmul.f32 %v780, 1.442695
    %v787 = vpow.pop %v786
    %v788 = vmul.f32 %v781, 1.442695
    %v789 = vpow.pop %v788
    %v790 = vadd.f32 %v783, 1.0
    %v791 = vadd.f32 %v785, 1.0
    %v792 = vadd.f32 %v787, 1.0
    %v793 = vadd.f32 %v789, 1.0
    %v794 = vrcp.pop %v790
    %v795 = vmul.f32 1.0, %v794
    %v796 = vrcp.pop %v791
    %v797 = vmul.f32 1.0, %v796
    %v798 = vrcp.pop %v792
    %v799 = vmul.f32 1.0, %v798
    %v800 = vrcp.pop %v793
    %v801 = vmul.f32 1.0, %v800
    %v802 = vmul.f32 %v742, %v795
    %v803 = vmul.f32 %v743, %v797
    %v804 = vmul.f32 %v776, %v799
    %v805 = vmul.f32 %v777, %v801
    %v806 = vld [vmem:[%s3] sm:$0xff]
    %807 = vrot.lane.b32.xlu0 %v802, 17
    %v808 = vpop.permute.xlu0 %807
    %809 = vrot.lane.b32.xlu0 %v803, 17
    %v810 = vpop.permute.xlu0 %809
    %811 = vrot.lane.b32.xlu0 %v804, 17
    %v812 = vpop.permute.xlu0 %811
    %813 = vrot.lane.b32.xlu0 %v805, 17
    %v814 = vpop.permute.xlu0 %813
    %v815 = vsel %vm234, %v812, %v814
    %v816 = vsel %vm234, %v810, %v812
    %v817 = vsel %vm234, %v808, %v810
    %v818 = vsel %vm234, %v814, %v808
    %v819 = vsel %vm247, %v818, 0.0
    %v820 = vsel %vm248, %v817, 0.0
    %v821 = vsel %vm249, %v816, 0.0
    %v822 = vsel %vm250, %v815, 0.0
    %824 = vset.pattern.permute.xlu0 0
    %825 = vperm.xlu0 %824, %v806
    %v826 = vpop.permute.xlu0 %825
    %v828 = vmul.f32 %v826, %v819
    %v829 = vmul.f32 %v826, %v820
    %v830 = vmul.f32 %v826, %v821
    %v831 = vmul.f32 %v826, %v822
    %v832 = vadd.f32 %v828, 0.0
    %v833 = vadd.f32 %v829, 0.0
    %v834 = vadd.f32 %v830, 0.0
    %v835 = vadd.f32 %v831, 0.0
    %836 = vrot.lane.b32.xlu0 %v802, 16
    %v837 = vpop.permute.xlu0 %836
    %838 = vrot.lane.b32.xlu0 %v803, 16
    %v839 = vpop.permute.xlu0 %838
    %840 = vrot.lane.b32.xlu0 %v804, 16
    %v841 = vpop.permute.xlu0 %840
    %842 = vrot.lane.b32.xlu0 %v805, 16
    %v843 = vpop.permute.xlu0 %842
    %v844 = vsel %vm263, %v841, %v843
    %v845 = vsel %vm263, %v839, %v841
    %v846 = vsel %vm263, %v837, %v839
    %v847 = vsel %vm263, %v843, %v837
    %v848 = vsel %vm272, %v847, 0.0
    %v849 = vsel %vm273, %v846, 0.0
    %v850 = vsel %vm274, %v845, 0.0
    %v851 = vsel %vm275, %v844, 0.0
    %852 = vset.pattern.permute.xlu0 1
    %853 = vperm.xlu0 %852, %v806
    %v854 = vpop.permute.xlu0 %853
    %v856 = vmul.f32 %v854, %v848
    %v857 = vmul.f32 %v854, %v849
    %v858 = vmul.f32 %v854, %v850
    %v859 = vmul.f32 %v854, %v851
    %v860 = vadd.f32 %v832, %v856
    %v861 = vadd.f32 %v833, %v857
    %v862 = vadd.f32 %v834, %v858
    %v863 = vadd.f32 %v835, %v859
    %864 = vrot.lane.b32.xlu0 %v802, 15
    %v865 = vpop.permute.xlu0 %864
    %866 = vrot.lane.b32.xlu0 %v803, 15
    %v867 = vpop.permute.xlu0 %866
    %868 = vrot.lane.b32.xlu0 %v804, 15
    %v869 = vpop.permute.xlu0 %868
    %870 = vrot.lane.b32.xlu0 %v805, 15
    %v871 = vpop.permute.xlu0 %870
    %v872 = vsel %vm288, %v869, %v871
    %v873 = vsel %vm288, %v867, %v869
    %v874 = vsel %vm288, %v865, %v867
    %v875 = vsel %vm288, %v871, %v865
    %v876 = vsel %vm301, %v875, 0.0
    %v877 = vsel %vm302, %v874, 0.0
    %v878 = vsel %vm303, %v873, 0.0
    %v879 = vsel %vm304, %v872, 0.0
    %880 = vset.pattern.permute.xlu0 2
    %881 = vperm.xlu0 %880, %v806
    %v882 = vpop.permute.xlu0 %881
    %v884 = vmul.f32 %v882, %v876
    %v885 = vmul.f32 %v882, %v877
    %v886 = vmul.f32 %v882, %v878
    %v887 = vmul.f32 %v882, %v879
    %v888 = vadd.f32 %v860, %v884
    %v889 = vadd.f32 %v861, %v885
    %v890 = vadd.f32 %v862, %v886
    %v891 = vadd.f32 %v863, %v887
    %892 = vrot.lane.b32.xlu0 %v802, 1
    %v893 = vpop.permute.xlu0 %892
    %894 = vrot.lane.b32.xlu0 %v803, 1
    %v895 = vpop.permute.xlu0 %894
    %896 = vrot.lane.b32.xlu0 %v804, 1
    %v897 = vpop.permute.xlu0 %896
    %898 = vrot.lane.b32.xlu0 %v805, 1
    %v899 = vpop.permute.xlu0 %898
    %v900 = vsel %vm317, %v897, %v899
    %v901 = vsel %vm317, %v895, %v897
    %v902 = vsel %vm317, %v893, %v895
    %v903 = vsel %vm317, %v899, %v893
    %v904 = vsel %vm326, %v903, 0.0
    %v905 = vsel %vm327, %v902, 0.0
    %v906 = vsel %vm328, %v901, 0.0
    %v907 = vsel %vm329, %v900, 0.0
    %908 = vset.pattern.permute.xlu0 3
    %909 = vperm.xlu0 %908, %v806
    %v910 = vpop.permute.xlu0 %909
    %v912 = vmul.f32 %v910, %v904
    %v913 = vmul.f32 %v910, %v905
    %v914 = vmul.f32 %v910, %v906
    %v915 = vmul.f32 %v910, %v907
    %v916 = vadd.f32 %v888, %v912
    %v917 = vadd.f32 %v889, %v913
    %v918 = vadd.f32 %v890, %v914
    %v919 = vadd.f32 %v891, %v915
    %920 = vset.pattern.permute.xlu0 4
    %921 = vperm.xlu0 %920, %v806
    %v922 = vpop.permute.xlu0 %921
    %v924 = vmul.f32 %v922, %v802
    %v925 = vmul.f32 %v922, %v803
    %v926 = vmul.f32 %v922, %v804
    %v927 = vmul.f32 %v922, %v805
    %v928 = vadd.f32 %v916, %v924
    %v929 = vadd.f32 %v917, %v925
    %v930 = vadd.f32 %v918, %v926
    %v931 = vadd.f32 %v919, %v927
    %932 = vrot.lane.b32.xlu0 %v802, 127
    %v933 = vpop.permute.xlu0 %932
    %934 = vrot.lane.b32.xlu0 %v803, 127
    %v935 = vpop.permute.xlu0 %934
    %936 = vrot.lane.b32.xlu0 %v804, 127
    %v937 = vpop.permute.xlu0 %936
    %938 = vrot.lane.b32.xlu0 %v805, 127
    %v939 = vpop.permute.xlu0 %938
    %v940 = vsel %vm342, %v937, %v939
    %v941 = vsel %vm342, %v935, %v937
    %v942 = vsel %vm342, %v933, %v935
    %v943 = vsel %vm342, %v939, %v933
    %v944 = vsel %vm351, %v942, 0.0
    %v945 = vsel %vm352, %v941, 0.0
    %v946 = vsel %vm353, %v940, 0.0
    %v947 = vsel %vm354, %v943, 0.0
    %948 = vset.pattern.permute.xlu0 5
    %949 = vperm.xlu0 %948, %v806
    %v950 = vpop.permute.xlu0 %949
    %v952 = vmul.f32 %v950, %v944
    %v953 = vmul.f32 %v950, %v945
    %v954 = vmul.f32 %v950, %v946
    %v955 = vmul.f32 %v950, %v947
    %v956 = vadd.f32 %v928, %v952
    %v957 = vadd.f32 %v929, %v953
    %v958 = vadd.f32 %v930, %v954
    %v959 = vadd.f32 %v931, %v955
    %960 = vrot.lane.b32.xlu0 %v802, 113
    %v961 = vpop.permute.xlu0 %960
    %962 = vrot.lane.b32.xlu0 %v803, 113
    %v963 = vpop.permute.xlu0 %962
    %964 = vrot.lane.b32.xlu0 %v804, 113
    %v965 = vpop.permute.xlu0 %964
    %966 = vrot.lane.b32.xlu0 %v805, 113
    %v967 = vpop.permute.xlu0 %966
    %v968 = vsel %vm367, %v965, %v967
    %v969 = vsel %vm367, %v963, %v965
    %v970 = vsel %vm367, %v961, %v963
    %v971 = vsel %vm367, %v967, %v961
    %v972 = vsel %vm380, %v970, 0.0
    %v973 = vsel %vm381, %v969, 0.0
    %v974 = vsel %vm382, %v968, 0.0
    %v975 = vsel %vm383, %v971, 0.0
    %976 = vset.pattern.permute.xlu0 6
    %977 = vperm.xlu0 %976, %v806
    %v978 = vpop.permute.xlu0 %977
    %v980 = vmul.f32 %v978, %v972
    %v981 = vmul.f32 %v978, %v973
    %v982 = vmul.f32 %v978, %v974
    %v983 = vmul.f32 %v978, %v975
    %v984 = vadd.f32 %v956, %v980
    %v985 = vadd.f32 %v957, %v981
    %v986 = vadd.f32 %v958, %v982
    %v987 = vadd.f32 %v959, %v983
    %988 = vrot.lane.b32.xlu0 %v802, 112
    %v989 = vpop.permute.xlu0 %988
    %990 = vrot.lane.b32.xlu0 %v803, 112
    %v991 = vpop.permute.xlu0 %990
    %992 = vrot.lane.b32.xlu0 %v804, 112
    %v993 = vpop.permute.xlu0 %992
    %994 = vrot.lane.b32.xlu0 %v805, 112
    %v995 = vpop.permute.xlu0 %994
    %v996 = vsel %vm396, %v993, %v995
    %v997 = vsel %vm396, %v991, %v993
    %v998 = vsel %vm396, %v989, %v991
    %v999 = vsel %vm396, %v995, %v989
    %v1000 = vsel %vm405, %v998, 0.0
    %v1001 = vsel %vm406, %v997, 0.0
    %v1002 = vsel %vm407, %v996, 0.0
    %v1003 = vsel %vm408, %v999, 0.0
    %1004 = vset.pattern.permute.xlu0 7
    %1005 = vperm.xlu0 %1004, %v806
    %v1006 = vpop.permute.xlu0 %1005
    %v1008 = vmul.f32 %v1006, %v1000
    %v1009 = vmul.f32 %v1006, %v1001
    %v1010 = vmul.f32 %v1006, %v1002
    %v1011 = vmul.f32 %v1006, %v1003
    %v1012 = vadd.f32 %v984, %v1008
    %v1013 = vadd.f32 %v985, %v1009
    %v1014 = vadd.f32 %v986, %v1010
    %v1015 = vadd.f32 %v987, %v1011
    %1016 = vrot.lane.b32.xlu0 %v802, 111
    %v1017 = vpop.permute.xlu0 %1016
    %1018 = vrot.lane.b32.xlu0 %v803, 111
    %v1019 = vpop.permute.xlu0 %1018
    %1020 = vrot.lane.b32.xlu0 %v804, 111
    %v1021 = vpop.permute.xlu0 %1020
    %1022 = vrot.lane.b32.xlu0 %v805, 111
    %v1023 = vpop.permute.xlu0 %1022
    %v1024 = vsel %vm421, %v1021, %v1023
    %v1025 = vsel %vm421, %v1019, %v1021
    %v1026 = vsel %vm421, %v1017, %v1019
    %v1027 = vsel %vm421, %v1023, %v1017
    %v1028 = vsel %vm434, %v1026, 0.0
    %v1029 = vsel %vm435, %v1025, 0.0
    %v1030 = vsel %vm436, %v1024, 0.0
    %v1031 = vsel %vm437, %v1027, 0.0
    %1032 = vset.pattern.permute.xlu0 8
    %1033 = vperm.xlu0 %1032, %v806
    %v1034 = vpop.permute.xlu0 %1033
    %v1036 = vmul.f32 %v1034, %v1028
    %v1037 = vmul.f32 %v1034, %v1029
    %v1038 = vmul.f32 %v1034, %v1030
    %v1039 = vmul.f32 %v1034, %v1031
    %v1040 = vadd.f32 %v1012, %v1036
    %v1041 = vadd.f32 %v1013, %v1037
    %v1042 = vadd.f32 %v1014, %v1038
    %v1043 = vadd.f32 %v1015, %v1039
    %v1044 = vrot.slane %v1040, 4
    %v1045 = vadd.f32 %v1040, %v1044
    %v1046 = vrot.slane %v1045, 2
    %v1047 = vadd.f32 %v1045, %v1046
    %v1048 = vrot.slane %v1047, 1
    %v1049 = vadd.f32 %v1047, %v1048
    %v1050 = vrot.slane %v1041, 4
    %v1051 = vadd.f32 %v1041, %v1050
    %v1052 = vrot.slane %v1051, 2
    %v1053 = vadd.f32 %v1051, %v1052
    %v1054 = vrot.slane %v1053, 1
    %v1055 = vadd.f32 %v1053, %v1054
    %v1056 = vrot.slane %v1042, 4
    %v1057 = vadd.f32 %v1042, %v1056
    %v1058 = vrot.slane %v1057, 2
    %v1059 = vadd.f32 %v1057, %v1058
    %v1060 = vrot.slane %v1059, 1
    %v1061 = vadd.f32 %v1059, %v1060
    %v1062 = vrot.slane %v1043, 4
    %v1063 = vadd.f32 %v1043, %v1062
    %v1064 = vrot.slane %v1063, 2
    %v1065 = vadd.f32 %v1063, %v1064
    %v1066 = vrot.slane %v1065, 1
    %v1067 = vadd.f32 %v1065, %v1066
    %s1068 = sadd.s32 %s33, 2
    %s1069 = sld [smem:[#allocation2 + %s1068]]
    %v1070 = vstv %s1069
    %v1071 = vadd.f32 %v1049, %v1070
    %v1072 = vadd.f32 %v1055, %v1070
    %v1073 = vadd.f32 %v1061, %v1070
    %v1074 = vadd.f32 %v1067, %v1070
    %v1079 = vcombine.low %v1071, %v1072
    %v1080 = vcombine.low %v1073, %v1074
    %v1081 = vrot.slane %v1079, 6
    %v1082 = vrot.slane %v1080, 6
    %v1085 = vsub.f32 %v31, %v1081
    %v1086 = vsub.f32 %v32, %v1082
    %v1087 = vand.u32 2147483647, %v1085
    %v1088 = vand.u32 2147483647, %v1086
    %v1091 = vlaneseq
    %v1092 = vshrl.u32 %v1091, 7
    %v1093 = vsub.s32 2, %v1092
    %v1094 = vrot.slane %v1087, %v1093
    %v1095 = vlaneseq
    %v1096 = vshrl.u32 %v1095, 7
    %v1097 = vsub.s32 6, %v1096
    %v1098 = vrot.slane %v1087, %v1097
    %v1099 = vlaneseq
    %v1100 = vshrl.u32 %v1099, 7
    %v1101 = vsub.s32 2, %v1100
    %v1102 = vrot.slane %v1088, %v1101
    %v1103 = vlaneseq
    %v1104 = vshrl.u32 %v1103, 7
    %v1105 = vsub.s32 6, %v1104
    %v1106 = vrot.slane %v1088, %v1105
    %v1111 = vsel %vm104, %v1094, 0.0
    %v1112 = vsel %vm104, %v1098, 0.0
    %v1113 = vadd.f32 %v1111, %v1112
    %v1114 = vsel %vm104, %v1102, 0.0
    %v1115 = vadd.f32 %v1113, %v1114
    %v1116 = vsel %vm104, %v1106, 0.0
    %v1117 = vadd.f32 %v1115, %v1116
    %1118 = vadd.xlane.f32.xlu0 %v1117
    %v1119 = vpop.xlane.xlu0 %1118
    %v1120 = vrot.slane %v1119, 4
    %v1121 = vadd.f32 %v1119, %v1120
    %v1122 = vrot.slane %v1121, 2
    %v1123 = vadd.f32 %v1121, %v1122
    %v1124 = vrot.slane %v1123, 1
    %v1125 = vadd.f32 %v1123, %v1124
    %s1126 = vtos %v1125
    %v1127 = vstv %s1126
    %1128 = vst [vmem:[%s4] sm:$0xff] %v1127
    // Predicated region
    $region22: #{ddpm_forward.1} parent=1 // pred_check
      _
    $region23: #{ddpm_forward.1} parent=1 // pred_check_branch
      %1130 = sbr.rel (0) target = $region25
    $region24: #{ddpm_forward.1} parent=1 // pred_region
      _
    $region25: #{ddpm_forward.1} parent=1 // pred_fallthru
      _
    // Predicated region
    $region26: #{ddpm_forward.1} parent=1 // pred_check
      _
    $region27: #{ddpm_forward.1} parent=1 // pred_check_branch
      %1132 = sbr.rel (0) target = $region29
    $region28: #{ddpm_forward.1} parent=1 // pred_region
      _
    $region29: #{ddpm_forward.1} parent=1 // pred_fallthru
      _
    %1133 = vsyncpa [#allocation3], 1

</llo_original>
